<compile_context>
chip_gen: v5e
topology: v5e:2x2
jax: 0.10.0
libtpu: 0.0.40
codegen_flags: <defaults>
</compile_context>

<pallas_src>
import functools

import jax
import jax.numpy as jnp
import numpy as np
from jax import lax
from jax.experimental import pallas as pl
from jax.experimental.pallas import tpu as pltpu

EPS = 1e-5
LANE = 128  # lane-dense channel padding


def _round_up(v, m):
    return (v + m - 1) // m * m


# ----------------------------- Pallas kernel --------------------------------
def _residual_block_kernel(ph_ref, w1_ref, b1_ref, w2_ref, b2_ref,
                           wsc_ref, bsc_ref, out_ref, y1pad_ref, *,
                           stride, ksize, Ho, Wo, Hph, Cin, Cp):
    """One grid step == one image; everything stays resident in VMEM."""
    s = stride
    HW = Ho * Wo

    # ---- conv1 (3x3, stride s) + folded BN + ReLU --------------------------
    acc1 = jnp.zeros((HW, Cp), jnp.float32)
    for ky in range(ksize):
        for kx in range(ksize):
            pa = (ky % s) * s + (kx % s)      # which stride-phase of the input
            oy, ox = ky // s, kx // s         # offset inside that phase
            r0 = pa * Hph + oy
            tap = ph_ref[0, r0:r0 + Ho, ox:ox + Wo, :].reshape(HW, Cin)
            acc1 = acc1 + jnp.dot(tap, w1_ref[ky * ksize + kx],
                                  preferred_element_type=jnp.float32)
    y1 = jnp.maximum(acc1 + b1_ref[...], 0.0)

    # Stage y1 into a zero-padded VMEM buffer -> halo for the stride-1 conv2.
    y1pad_ref[...] = jnp.zeros(y1pad_ref.shape, y1pad_ref.dtype)
    y1pad_ref[1:Ho + 1, 1:Wo + 1, :] = (
        y1.reshape(Ho, Wo, Cp).astype(y1pad_ref.dtype))

    # ---- shortcut: 1x1 conv (projection, or identity weights) --------------
    pa = (1 % s) * s + (1 % s)
    off = 1 // s
    r0 = pa * Hph + off
    xin = ph_ref[0, r0:r0 + Ho, off:off + Wo, :].reshape(HW, Cin)
    acc2 = jnp.dot(xin, wsc_ref[...], preferred_element_type=jnp.float32)
    acc2 = acc2 + bsc_ref[...]

    # ---- conv2 (3x3, stride 1) + folded BN + residual + ReLU ---------------
    for ky in range(ksize):
        for kx in range(ksize):
            tap = y1pad_ref[ky:ky + Ho, kx:kx + Wo, :].reshape(HW, Cp)
            acc2 = acc2 + jnp.dot(tap, w2_ref[ky * ksize + kx],
                                  preferred_element_type=jnp.float32)
    y = jnp.maximum(acc2 + b2_ref[...], 0.0)
    out_ref[0] = y.reshape(Ho, Wo, Cp).astype(out_ref.dtype)


# ------------------------------ JAX wrapper ----------------------------------
def _fold_bn_into_conv(w_oihw, b, gamma, beta, mean, var):
    """BN (inference) folded into conv: per-tap weights (kh*kw, Cin, Cout)
    scaled by BN gain, plus a single per-channel bias."""
    scale = gamma / jnp.sqrt(var + EPS)
    taps = jnp.transpose(w_oihw, (2, 3, 1, 0))          # (kh, kw, Cin, Cout)
    taps = taps.reshape(-1, w_oihw.shape[1], w_oihw.shape[0]) * scale[None, None, :]
    bias = (b - mean) * scale + beta
    return taps, bias


def _pad_axis(a, axis, target):
    pad = target - a.shape[axis]
    if pad == 0:
        return a
    widths = [(0, 0)] * a.ndim
    widths[axis] = (0, pad)
    return jnp.pad(a, widths)


def residual_block(x_nchw, params, stride, compute_dtype=jnp.bfloat16):
    N, Cin, H, W = x_nchw.shape
    Cout = params["w1"].shape[0]
    s, ksize, pad = stride, 3, 1
    Cp = _round_up(max(Cout, 1), LANE)                   # lane-dense channels
    Ho = (H + 2 * pad - ksize) // s + 1
    Wo = (W + 2 * pad - ksize) // s + 1
    Hph = (ksize - 1) // s + Ho                          # rows needed / phase
    Wph = (ksize - 1) // s + Wo
    s2 = s * s

    # ---- phase (space-to-batch) decomposition of the zero-padded input -----
    # Total volume ~1x the input; lets the kernel take contiguous slices only.
    x_nhwc = jnp.transpose(x_nchw, (0, 2, 3, 1)).astype(jnp.float32)
    xp = jnp.pad(x_nhwc, ((0, 0), (pad, pad), (pad, pad), (0, 0)))
    phase_list = []
    for a in range(s):
        for b in range(s):
            ph = xp[:, a::s, b::s, :][:, :Hph, :Wph, :]
            ph = jnp.pad(ph, ((0, 0), (0, Hph - ph.shape[1]),
                              (0, Wph - ph.shape[2]), (0, 0)))
            phase_list.append(ph)
    # (N, s*s*Hph, Wph, Cin); phase p occupies rows [p*Hph, (p+1)*Hph)
    phases = jnp.concatenate(phase_list, axis=1).astype(compute_dtype)

    # ---- fold BN into weights/bias, pad channels to Cp ----------------------
    w1_t, b1 = _fold_bn_into_conv(params["w1"], params["b1"], params["g1"],
                                  params["beta1"], params["m1"], params["v1"])
    w1_t = _pad_axis(w1_t, 2, Cp).astype(compute_dtype)            # (9, Cin, Cp)
    b1 = _pad_axis(b1.reshape(1, Cout), 1, Cp).astype(jnp.float32)

    w2_t, b2 = _fold_bn_into_conv(params["w2"], params["b2"], params["g2"],
                                  params["beta2"], params["m2"], params["v2"])
    w2_t = _pad_axis(_pad_axis(w2_t, 2, Cp), 1, Cp).astype(compute_dtype)  # (9, Cp, Cp)
    b2 = _pad_axis(b2.reshape(1, Cout), 1, Cp).astype(jnp.float32)

    if s != 1 or Cin != Cout:
        wsc_t, bsc = _fold_bn_into_conv(params["wsc"], params["bsc"],
                                        params["gsc"], params["betasc"],
                                        params["msc"], params["vsc"])
        wsc = _pad_axis(wsc_t.reshape(Cin, Cout), 1, Cp).astype(compute_dtype)
        bsc = _pad_axis(bsc.reshape(1, Cout), 1, Cp).astype(jnp.float32)
    else:  # identity shortcut == 1x1 conv with identity weights / zero bias
        wsc = jnp.eye(Cin, Cp, dtype=compute_dtype)
        bsc = jnp.zeros((1, Cp), jnp.float32)

    kernel = functools.partial(
        _residual_block_kernel, stride=s, ksize=ksize,
        Ho=Ho, Wo=Wo, Hph=Hph, Cin=Cin, Cp=Cp)

    out = pl.pallas_call(
        kernel,
        out_shape=jax.ShapeDtypeStruct((N, Ho, Wo, Cp), jnp.float32),
        grid_spec=pltpu.PrefetchScalarGridSpec(
            num_scalar_prefetch=0,
            grid=(N,),
            in_specs=[
                pl.BlockSpec((1, s2 * Hph, Wph, Cin), lambda n: (n, 0, 0, 0)),
                pl.BlockSpec((ksize * ksize, Cin, Cp), lambda n: (0, 0, 0)),
                pl.BlockSpec((1, Cp), lambda n: (0, 0)),
                pl.BlockSpec((ksize * ksize, Cp, Cp), lambda n: (0, 0, 0)),
                pl.BlockSpec((1, Cp), lambda n: (0, 0)),
                pl.BlockSpec((Cin, Cp), lambda n: (0, 0)),
                pl.BlockSpec((1, Cp), lambda n: (0, 0)),
            ],
            out_specs=pl.BlockSpec((1, Ho, Wo, Cp), lambda n: (n, 0, 0, 0)),
            scratch_shapes=[pltpu.VMEM((Ho + 2, Wo + 2, Cp), compute_dtype)],
        ),
        compiler_params=pltpu.CompilerParams(
            dimension_semantics=("parallel",)),
    )(phases, w1_t, b1, w2_t, b2, wsc, bsc)

    out = out[:, :, :, :Cout]                 # drop lane padding
    return jnp.transpose(out, (0, 3, 1, 2))   # back to NCHW


# --------------------------- pure-JAX reference ------------------------------
def _ref_conv(x, w, b, stride, pad):
    y = lax.conv_general_dilated(x, w, (stride, stride), [(pad, pad), (pad, pad)],
                                 dimension_numbers=("NCHW", "OIHW", "NCHW"))
    return y + b[None, :, None, None]


def _ref_bn(y, g, bta, m, v):
    return (y - m[None, :, None, None]) / jnp.sqrt(v[None, :, None, None] + EPS) \
        * g[None, :, None, None] + bta[None, :, None, None]


def residual_block_ref(x, p, stride):
    y = jax.nn.relu(_ref_bn(_ref_conv(x, p["w1"], p["b1"], stride, 1),
                            p["g1"], p["beta1"], p["m1"], p["v1"]))
    y = _ref_bn(_ref_conv(y, p["w2"], p["b2"], 1, 1),
                p["g2"], p["beta2"], p["m2"], p["v2"])
    in_ch, out_ch = p["w1"].shape[1], p["w1"].shape[0]
    if stride != 1 or in_ch != out_ch:
        sc = _ref_bn(_ref_conv(x, p["wsc"], p["bsc"], stride, 0),
                     p["gsc"], p["betasc"], p["msc"], p["vsc"])
    else:
        sc = x
    return jax.nn.relu(y + sc)


# --------------------------------- main --------------------------------------
if __name__ == "__main__":
    def rn(k, shape, scale=0.2):
        return jax.random.normal(k, shape, jnp.float32) * scale

    def make_params(key, cin, cout, with_shortcut):
        ks = jax.random.split(key, 18)
        p = {
            "w1": rn(ks[0], (cout, cin, 3, 3)),  "b1": rn(ks[1], (cout,)),
            "g1": 1.0 + rn(ks[2], (cout,), 0.1), "beta1": rn(ks[3], (cout,), 0.1),
            "m1": rn(ks[4], (cout,), 0.1),
            "v1": 1.0 + jnp.abs(rn(ks[5], (cout,), 0.1)),
            "w2": rn(ks[6], (cout, cout, 3, 3)), "b2": rn(ks[7], (cout,)),
            "g2": 1.0 + rn(ks[8], (cout,), 0.1), "beta2": rn(ks[9], (cout,), 0.1),
            "m2": rn(ks[10], (cout,), 0.1),
            "v2": 1.0 + jnp.abs(rn(ks[11], (cout,), 0.1)),
        }
        if with_shortcut:
            p.update({
                "wsc": rn(ks[12], (cout, cin, 1, 1)), "bsc": rn(ks[13], (cout,)),
                "gsc": 1.0 + rn(ks[14], (cout,), 0.1),
                "betasc": rn(ks[15], (cout,), 0.1),
                "msc": rn(ks[16], (cout,), 0.1),
                "vsc": 1.0 + jnp.abs(rn(ks[17], (cout,), 0.1)),
            })
        return p

    key = jax.random.PRNGKey(0)
    kp1, kx1, kp2, kx2 = jax.random.split(key, 4)

    # Case 1: stride-2 block with 1x1 projection shortcut (Cin != Cout).
    N, Cin, Cout, H, W, stride = 2, 4, 8, 16, 16, 2
    params = make_params(kp1, Cin, Cout, True)
    x = jax.random.normal(kx1, (N, Cin, H, W), jnp.float32)
    ref = residual_block_ref(x, params, stride)

    out_f32 = jax.block_until_ready(
        residual_block(x, params, stride, compute_dtype=jnp.float32))
    np.testing.assert_allclose(np.asarray(out_f32), np.asarray(ref),
                               rtol=1e-3, atol=1e-3)

    out_bf16 = jax.block_until_ready(residual_block(x, params, stride))
    np.testing.assert_allclose(np.asarray(out_bf16), np.asarray(ref),
                               rtol=5e-2, atol=5e-2)

    # Case 2: stride-1 block with identity shortcut (Cin == Cout).
    N2, C2, H2, W2 = 2, 8, 8, 8
    params2 = make_params(kp2, C2, C2, False)
    x2 = jax.random.normal(kx2, (N2, C2, H2, W2), jnp.float32)
    ref2 = residual_block_ref(x2, params2, 1)
    out2 = jax.block_until_ready(residual_block(x2, params2, 1))
    np.testing.assert_allclose(np.asarray(out2), np.asarray(ref2),
                               rtol=5e-2, atol=5e-2)

    print("KERNEL_OK")
</pallas_src>

<mosaic_0001>
module attributes {stable_mosaic.version = 11 : i64} {
  func.func @_residual_block_kernel(%arg0: i32, %arg1: memref<1x36x9x4xf32, #tpu.memory_space<vmem>>, %arg2: memref<9x4x128xf32, #tpu.memory_space<vmem>>, %arg3: memref<1x128xf32, #tpu.memory_space<vmem>>, %arg4: memref<9x128x128xf32, #tpu.memory_space<vmem>>, %arg5: memref<1x128xf32, #tpu.memory_space<vmem>>, %arg6: memref<4x128xf32, #tpu.memory_space<vmem>>, %arg7: memref<1x128xf32, #tpu.memory_space<vmem>>, %arg8: memref<1x8x8x128xf32, #tpu.memory_space<vmem>>, %arg9: memref<10x10x128xf32, #tpu.memory_space<vmem>>) attributes {dimension_semantics = [#tpu.dimension_semantics<parallel>], iteration_bounds = array<i64: 2>, scalar_prefetch = 0 : i64, scratch_operands = 1 : i64, tpu.core_type = #tpu.core_type<tc>, window_params = [{transform_indices = @transform_0, window_bounds = array<i64: 1, 36, 9, 4>}, {pipeline_mode = #tpu.pipeline_mode<synchronous>, transform_indices = @transform_1, window_bounds = array<i64: 9, 4, 128>}, {pipeline_mode = #tpu.pipeline_mode<synchronous>, transform_indices = @transform_2, window_bounds = array<i64: 1, 128>}, {pipeline_mode = #tpu.pipeline_mode<synchronous>, transform_indices = @transform_3, window_bounds = array<i64: 9, 128, 128>}, {pipeline_mode = #tpu.pipeline_mode<synchronous>, transform_indices = @transform_4, window_bounds = array<i64: 1, 128>}, {pipeline_mode = #tpu.pipeline_mode<synchronous>, transform_indices = @transform_5, window_bounds = array<i64: 4, 128>}, {pipeline_mode = #tpu.pipeline_mode<synchronous>, transform_indices = @transform_6, window_bounds = array<i64: 1, 128>}, {transform_indices = @transform_7, window_bounds = array<i64: 1, 8, 8, 128>}]} {
    %cst = arith.constant 0.000000e+00 : f32
    %0 = vector.broadcast %cst : f32 to vector<64x128xf32>
    %c0 = arith.constant 0 : index
    %c0_0 = arith.constant 0 : index
    %c0_1 = arith.constant 0 : index
    %c0_2 = arith.constant 0 : index
    %1 = vector.load %arg1[%c0, %c0_0, %c0_1, %c0_2] : memref<1x36x9x4xf32, #tpu.memory_space<vmem>>, vector<1x8x8x4xf32>
    %2 = vector.shape_cast %1 : vector<1x8x8x4xf32> to vector<8x8x4xf32>
    %3 = vector.shape_cast %2 : vector<8x8x4xf32> to vector<64x4xf32>
    %c0_3 = arith.constant 0 : index
    %c0_4 = arith.constant 0 : index
    %c0_5 = arith.constant 0 : index
    %4 = vector.load %arg2[%c0_3, %c0_4, %c0_5] : memref<9x4x128xf32, #tpu.memory_space<vmem>>, vector<1x4x128xf32>
    %5 = vector.shape_cast %4 : vector<1x4x128xf32> to vector<4x128xf32>
    %cst_6 = arith.constant dense<0.000000e+00> : vector<64x128xf32>
    %6 = tpu.matmul %3, %5, %cst_6 {dimension_numbers = #tpu.dot_dimension_numbers<[1], [0], [0], [1], [0, 0, 1, 1], [], []>} : vector<64x4xf32>, vector<4x128xf32>, vector<64x128xf32> -> vector<64x128xf32>
    %7 = arith.addf %0, %6 : vector<64x128xf32>
    %c0_7 = arith.constant 0 : index
    %c9 = arith.constant 9 : index
    %c0_8 = arith.constant 0 : index
    %c0_9 = arith.constant 0 : index
    %8 = vector.load %arg1[%c0_7, %c9, %c0_8, %c0_9] : memref<1x36x9x4xf32, #tpu.memory_space<vmem>>, vector<1x8x8x4xf32>
    %9 = vector.shape_cast %8 : vector<1x8x8x4xf32> to vector<8x8x4xf32>
    %10 = vector.shape_cast %9 : vector<8x8x4xf32> to vector<64x4xf32>
    %c1 = arith.constant 1 : index
    %c0_10 = arith.constant 0 : index
    %c0_11 = arith.constant 0 : index
    %11 = vector.load %arg2[%c1, %c0_10, %c0_11] : memref<9x4x128xf32, #tpu.memory_space<vmem>>, vector<1x4x128xf32>
    %12 = vector.shape_cast %11 : vector<1x4x128xf32> to vector<4x128xf32>
    %cst_12 = arith.constant dense<0.000000e+00> : vector<64x128xf32>
    %13 = tpu.matmul %10, %12, %cst_12 {dimension_numbers = #tpu.dot_dimension_numbers<[1], [0], [0], [1], [0, 0, 1, 1], [], []>} : vector<64x4xf32>, vector<4x128xf32>, vector<64x128xf32> -> vector<64x128xf32>
    %14 = arith.addf %7, %13 : vector<64x128xf32>
    %c0_13 = arith.constant 0 : index
    %c0_14 = arith.constant 0 : index
    %c1_15 = arith.constant 1 : index
    %c0_16 = arith.constant 0 : index
    %15 = vector.load %arg1[%c0_13, %c0_14, %c1_15, %c0_16] : memref<1x36x9x4xf32, #tpu.memory_space<vmem>>, vector<1x8x8x4xf32>
    %16 = vector.shape_cast %15 : vector<1x8x8x4xf32> to vector<8x8x4xf32>
    %17 = vector.shape_cast %16 : vector<8x8x4xf32> to vector<64x4xf32>
    %c2 = arith.constant 2 : index
    %c0_17 = arith.constant 0 : index
    %c0_18 = arith.constant 0 : index
    %18 = vector.load %arg2[%c2, %c0_17, %c0_18] : memref<9x4x128xf32, #tpu.memory_space<vmem>>, vector<1x4x128xf32>
    %19 = vector.shape_cast %18 : vector<1x4x128xf32> to vector<4x128xf32>
    %cst_19 = arith.constant dense<0.000000e+00> : vector<64x128xf32>
    %20 = tpu.matmul %17, %19, %cst_19 {dimension_numbers = #tpu.dot_dimension_numbers<[1], [0], [0], [1], [0, 0, 1, 1], [], []>} : vector<64x4xf32>, vector<4x128xf32>, vector<64x128xf32> -> vector<64x128xf32>
    %21 = arith.addf %14, %20 : vector<64x128xf32>
    %c0_20 = arith.constant 0 : index
    %c18 = arith.constant 18 : index
    %c0_21 = arith.constant 0 : index
    %c0_22 = arith.constant 0 : index
    %22 = vector.load %arg1[%c0_20, %c18, %c0_21, %c0_22] : memref<1x36x9x4xf32, #tpu.memory_space<vmem>>, vector<1x8x8x4xf32>
    %23 = vector.shape_cast %22 : vector<1x8x8x4xf32> to vector<8x8x4xf32>
    %24 = vector.shape_cast %23 : vector<8x8x4xf32> to vector<64x4xf32>
    %c3 = arith.constant 3 : index
    %c0_23 = arith.constant 0 : index
    %c0_24 = arith.constant 0 : index
    %25 = vector.load %arg2[%c3, %c0_23, %c0_24] : memref<9x4x128xf32, #tpu.memory_space<vmem>>, vector<1x4x128xf32>
    %26 = vector.shape_cast %25 : vector<1x4x128xf32> to vector<4x128xf32>
    %cst_25 = arith.constant dense<0.000000e+00> : vector<64x128xf32>
    %27 = tpu.matmul %24, %26, %cst_25 {dimension_numbers = #tpu.dot_dimension_numbers<[1], [0], [0], [1], [0, 0, 1, 1], [], []>} : vector<64x4xf32>, vector<4x128xf32>, vector<64x128xf32> -> vector<64x128xf32>
    %28 = arith.addf %21, %27 : vector<64x128xf32>
    %c0_26 = arith.constant 0 : index
    %c27 = arith.constant 27 : index
    %c0_27 = arith.constant 0 : index
    %c0_28 = arith.constant 0 : index
    %29 = vector.load %arg1[%c0_26, %c27, %c0_27, %c0_28] : memref<1x36x9x4xf32, #tpu.memory_space<vmem>>, vector<1x8x8x4xf32>
    %30 = vector.shape_cast %29 : vector<1x8x8x4xf32> to vector<8x8x4xf32>
    %31 = vector.shape_cast %30 : vector<8x8x4xf32> to vector<64x4xf32>
    %c4 = arith.constant 4 : index
    %c0_29 = arith.constant 0 : index
    %c0_30 = arith.constant 0 : index
    %32 = vector.load %arg2[%c4, %c0_29, %c0_30] : memref<9x4x128xf32, #tpu.memory_space<vmem>>, vector<1x4x128xf32>
    %33 = vector.shape_cast %32 : vector<1x4x128xf32> to vector<4x128xf32>
    %cst_31 = arith.constant dense<0.000000e+00> : vector<64x128xf32>
    %34 = tpu.matmul %31, %33, %cst_31 {dimension_numbers = #tpu.dot_dimension_numbers<[1], [0], [0], [1], [0, 0, 1, 1], [], []>} : vector<64x4xf32>, vector<4x128xf32>, vector<64x128xf32> -> vector<64x128xf32>
    %35 = arith.addf %28, %34 : vector<64x128xf32>
    %c0_32 = arith.constant 0 : index
    %c18_33 = arith.constant 18 : index
    %c1_34 = arith.constant 1 : index
    %c0_35 = arith.constant 0 : index
    %36 = vector.load %arg1[%c0_32, %c18_33, %c1_34, %c0_35] : memref<1x36x9x4xf32, #tpu.memory_space<vmem>>, vector<1x8x8x4xf32>
    %37 = vector.shape_cast %36 : vector<1x8x8x4xf32> to vector<8x8x4xf32>
    %38 = vector.shape_cast %37 : vector<8x8x4xf32> to vector<64x4xf32>
    %c5 = arith.constant 5 : index
    %c0_36 = arith.constant 0 : index
    %c0_37 = arith.constant 0 : index
    %39 = vector.load %arg2[%c5, %c0_36, %c0_37] : memref<9x4x128xf32, #tpu.memory_space<vmem>>, vector<1x4x128xf32>
    %40 = vector.shape_cast %39 : vector<1x4x128xf32> to vector<4x128xf32>
    %cst_38 = arith.constant dense<0.000000e+00> : vector<64x128xf32>
    %41 = tpu.matmul %38, %40, %cst_38 {dimension_numbers = #tpu.dot_dimension_numbers<[1], [0], [0], [1], [0, 0, 1, 1], [], []>} : vector<64x4xf32>, vector<4x128xf32>, vector<64x128xf32> -> vector<64x128xf32>
    %42 = arith.addf %35, %41 : vector<64x128xf32>
    %c0_39 = arith.constant 0 : index
    %c1_40 = arith.constant 1 : index
    %c0_41 = arith.constant 0 : index
    %c0_42 = arith.constant 0 : index
    %43 = vector.load %arg1[%c0_39, %c1_40, %c0_41, %c0_42] : memref<1x36x9x4xf32, #tpu.memory_space<vmem>>, vector<1x8x8x4xf32>
    %44 = vector.shape_cast %43 : vector<1x8x8x4xf32> to vector<8x8x4xf32>
    %45 = vector.shape_cast %44 : vector<8x8x4xf32> to vector<64x4xf32>
    %c6 = arith.constant 6 : index
    %c0_43 = arith.constant 0 : index
    %c0_44 = arith.constant 0 : index
    %46 = vector.load %arg2[%c6, %c0_43, %c0_44] : memref<9x4x128xf32, #tpu.memory_space<vmem>>, vector<1x4x128xf32>
    %47 = vector.shape_cast %46 : vector<1x4x128xf32> to vector<4x128xf32>
    %cst_45 = arith.constant dense<0.000000e+00> : vector<64x128xf32>
    %48 = tpu.matmul %45, %47, %cst_45 {dimension_numbers = #tpu.dot_dimension_numbers<[1], [0], [0], [1], [0, 0, 1, 1], [], []>} : vector<64x4xf32>, vector<4x128xf32>, vector<64x128xf32> -> vector<64x128xf32>
    %49 = arith.addf %42, %48 : vector<64x128xf32>
    %c0_46 = arith.constant 0 : index
    %c10 = arith.constant 10 : index
    %c0_47 = arith.constant 0 : index
    %c0_48 = arith.constant 0 : index
    %50 = vector.load %arg1[%c0_46, %c10, %c0_47, %c0_48] : memref<1x36x9x4xf32, #tpu.memory_space<vmem>>, vector<1x8x8x4xf32>
    %51 = vector.shape_cast %50 : vector<1x8x8x4xf32> to vector<8x8x4xf32>
    %52 = vector.shape_cast %51 : vector<8x8x4xf32> to vector<64x4xf32>
    %c7 = arith.constant 7 : index
    %c0_49 = arith.constant 0 : index
    %c0_50 = arith.constant 0 : index
    %53 = vector.load %arg2[%c7, %c0_49, %c0_50] : memref<9x4x128xf32, #tpu.memory_space<vmem>>, vector<1x4x128xf32>
    %54 = vector.shape_cast %53 : vector<1x4x128xf32> to vector<4x128xf32>
    %cst_51 = arith.constant dense<0.000000e+00> : vector<64x128xf32>
    %55 = tpu.matmul %52, %54, %cst_51 {dimension_numbers = #tpu.dot_dimension_numbers<[1], [0], [0], [1], [0, 0, 1, 1], [], []>} : vector<64x4xf32>, vector<4x128xf32>, vector<64x128xf32> -> vector<64x128xf32>
    %56 = arith.addf %49, %55 : vector<64x128xf32>
    %c0_52 = arith.constant 0 : index
    %c1_53 = arith.constant 1 : index
    %c1_54 = arith.constant 1 : index
    %c0_55 = arith.constant 0 : index
    %57 = vector.load %arg1[%c0_52, %c1_53, %c1_54, %c0_55] : memref<1x36x9x4xf32, #tpu.memory_space<vmem>>, vector<1x8x8x4xf32>
    %58 = vector.shape_cast %57 : vector<1x8x8x4xf32> to vector<8x8x4xf32>
    %59 = vector.shape_cast %58 : vector<8x8x4xf32> to vector<64x4xf32>
    %c8 = arith.constant 8 : index
    %c0_56 = arith.constant 0 : index
    %c0_57 = arith.constant 0 : index
    %60 = vector.load %arg2[%c8, %c0_56, %c0_57] : memref<9x4x128xf32, #tpu.memory_space<vmem>>, vector<1x4x128xf32>
    %61 = vector.shape_cast %60 : vector<1x4x128xf32> to vector<4x128xf32>
    %cst_58 = arith.constant dense<0.000000e+00> : vector<64x128xf32>
    %62 = tpu.matmul %59, %61, %cst_58 {dimension_numbers = #tpu.dot_dimension_numbers<[1], [0], [0], [1], [0, 0, 1, 1], [], []>} : vector<64x4xf32>, vector<4x128xf32>, vector<64x128xf32> -> vector<64x128xf32>
    %63 = arith.addf %56, %62 : vector<64x128xf32>
    %c0_59 = arith.constant 0 : index
    %c0_60 = arith.constant 0 : index
    %64 = vector.load %arg3[%c0_59, %c0_60] : memref<1x128xf32, #tpu.memory_space<vmem>>, vector<1x128xf32>
    %65 = vector.broadcast %64 : vector<1x128xf32> to vector<64x128xf32>
    %66 = arith.addf %63, %65 : vector<64x128xf32>
    %cst_61 = arith.constant 0.000000e+00 : f32
    %67 = vector.broadcast %cst_61 : f32 to vector<64x128xf32>
    %68 = arith.maximumf %66, %67 : vector<64x128xf32>
    %cst_62 = arith.constant 0.000000e+00 : f32
    %69 = vector.broadcast %cst_62 : f32 to vector<10x10x128xf32>
    %c0_63 = arith.constant 0 : index
    %c0_64 = arith.constant 0 : index
    %c0_65 = arith.constant 0 : index
    %70 = vector.load %arg9[%c0_63, %c0_64, %c0_65] : memref<10x10x128xf32, #tpu.memory_space<vmem>>, vector<10x10x128xf32>
    tpu.vector_store %arg9[%c0_63, %c0_64, %c0_65], %69 {strides = array<i32>} : memref<10x10x128xf32, #tpu.memory_space<vmem>>, vector<10x10x128xf32>,
    %71 = vector.shape_cast %68 : vector<64x128xf32> to vector<8x8x128xf32>
    %c1_66 = arith.constant 1 : index
    %c1_67 = arith.constant 1 : index
    %c0_68 = arith.constant 0 : index
    %72 = vector.load %arg9[%c1_66, %c1_67, %c0_68] : memref<10x10x128xf32, #tpu.memory_space<vmem>>, vector<8x8x128xf32>
    tpu.vector_store %arg9[%c1_66, %c1_67, %c0_68], %71 {strides = array<i32>} : memref<10x10x128xf32, #tpu.memory_space<vmem>>, vector<8x8x128xf32>,
    %c0_69 = arith.constant 0 : index
    %c27_70 = arith.constant 27 : index
    %c0_71 = arith.constant 0 : index
    %c0_72 = arith.constant 0 : index
    %73 = vector.load %arg1[%c0_69, %c27_70, %c0_71, %c0_72] : memref<1x36x9x4xf32, #tpu.memory_space<vmem>>, vector<1x8x8x4xf32>
    %74 = vector.shape_cast %73 : vector<1x8x8x4xf32> to vector<8x8x4xf32>
    %75 = vector.shape_cast %74 : vector<8x8x4xf32> to vector<64x4xf32>
    %c0_73 = arith.constant 0 : index
    %c0_74 = arith.constant 0 : index
    %76 = vector.load %arg6[%c0_73, %c0_74] : memref<4x128xf32, #tpu.memory_space<vmem>>, vector<4x128xf32>
    %cst_75 = arith.constant dense<0.000000e+00> : vector<64x128xf32>
    %77 = tpu.matmul %75, %76, %cst_75 {dimension_numbers = #tpu.dot_dimension_numbers<[1], [0], [0], [1], [0, 0, 1, 1], [], []>} : vector<64x4xf32>, vector<4x128xf32>, vector<64x128xf32> -> vector<64x128xf32>
    %c0_76 = arith.constant 0 : index
    %c0_77 = arith.constant 0 : index
    %78 = vector.load %arg7[%c0_76, %c0_77] : memref<1x128xf32, #tpu.memory_space<vmem>>, vector<1x128xf32>
    %79 = vector.broadcast %78 : vector<1x128xf32> to vector<64x128xf32>
    %80 = arith.addf %77, %79 : vector<64x128xf32>
    %c0_78 = arith.constant 0 : index
    %c0_79 = arith.constant 0 : index
    %c0_80 = arith.constant 0 : index
    %81 = vector.load %arg9[%c0_78, %c0_79, %c0_80] : memref<10x10x128xf32, #tpu.memory_space<vmem>>, vector<8x8x128xf32>
    %82 = vector.shape_cast %81 : vector<8x8x128xf32> to vector<64x128xf32>
    %c0_81 = arith.constant 0 : index
    %c0_82 = arith.constant 0 : index
    %c0_83 = arith.constant 0 : index
    %83 = vector.load %arg4[%c0_81, %c0_82, %c0_83] : memref<9x128x128xf32, #tpu.memory_space<vmem>>, vector<1x128x128xf32>
    %84 = vector.shape_cast %83 : vector<1x128x128xf32> to vector<128x128xf32>
    %cst_84 = arith.constant dense<0.000000e+00> : vector<64x128xf32>
    %85 = tpu.matmul %82, %84, %cst_84 {dimension_numbers = #tpu.dot_dimension_numbers<[1], [0], [0], [1], [0, 0, 1, 1], [], []>} : vector<64x128xf32>, vector<128x128xf32>, vector<64x128xf32> -> vector<64x128xf32>
    %86 = arith.addf %80, %85 : vector<64x128xf32>
    %c0_85 = arith.constant 0 : index
    %c1_86 = arith.constant 1 : index
    %c0_87 = arith.constant 0 : index
    %87 = vector.load %arg9[%c0_85, %c1_86, %c0_87] : memref<10x10x128xf32, #tpu.memory_space<vmem>>, vector<8x8x128xf32>
    %88 = vector.shape_cast %87 : vector<8x8x128xf32> to vector<64x128xf32>
    %c1_88 = arith.constant 1 : index
    %c0_89 = arith.constant 0 : index
    %c0_90 = arith.constant 0 : index
    %89 = vector.load %arg4[%c1_88, %c0_89, %c0_90] : memref<9x128x128xf32, #tpu.memory_space<vmem>>, vector<1x128x128xf32>
    %90 = vector.shape_cast %89 : vector<1x128x128xf32> to vector<128x128xf32>
    %cst_91 = arith.constant dense<0.000000e+00> : vector<64x128xf32>
    %91 = tpu.matmul %88, %90, %cst_91 {dimension_numbers = #tpu.dot_dimension_numbers<[1], [0], [0], [1], [0, 0, 1, 1], [], []>} : vector<64x128xf32>, vector<128x128xf32>, vector<64x128xf32> -> vector<64x128xf32>
    %92 = arith.addf %86, %91 : vector<64x128xf32>
    %c0_92 = arith.constant 0 : index
    %c2_93 = arith.constant 2 : index
    %c0_94 = arith.constant 0 : index
    %93 = vector.load %arg9[%c0_92, %c2_93, %c0_94] : memref<10x10x128xf32, #tpu.memory_space<vmem>>, vector<8x8x128xf32>
    %94 = vector.shape_cast %93 : vector<8x8x128xf32> to vector<64x128xf32>
    %c2_95 = arith.constant 2 : index
    %c0_96 = arith.constant 0 : index
    %c0_97 = arith.constant 0 : index
    %95 = vector.load %arg4[%c2_95, %c0_96, %c0_97] : memref<9x128x128xf32, #tpu.memory_space<vmem>>, vector<1x128x128xf32>
    %96 = vector.shape_cast %95 : vector<1x128x128xf32> to vector<128x128xf32>
    %cst_98 = arith.constant dense<0.000000e+00> : vector<64x128xf32>
    %97 = tpu.matmul %94, %96, %cst_98 {dimension_numbers = #tpu.dot_dimension_numbers<[1], [0], [0], [1], [0, 0, 1, 1], [], []>} : vector<64x128xf32>, vector<128x128xf32>, vector<64x128xf32> -> vector<64x128xf32>
    %98 = arith.addf %92, %97 : vector<64x128xf32>
    %c1_99 = arith.constant 1 : index
    %c0_100 = arith.constant 0 : index
    %c0_101 = arith.constant 0 : index
    %99 = vector.load %arg9[%c1_99, %c0_100, %c0_101] : memref<10x10x128xf32, #tpu.memory_space<vmem>>, vector<8x8x128xf32>
    %100 = vector.shape_cast %99 : vector<8x8x128xf32> to vector<64x128xf32>
    %c3_102 = arith.constant 3 : index
    %c0_103 = arith.constant 0 : index
    %c0_104 = arith.constant 0 : index
    %101 = vector.load %arg4[%c3_102, %c0_103, %c0_104] : memref<9x128x128xf32, #tpu.memory_space<vmem>>, vector<1x128x128xf32>
    %102 = vector.shape_cast %101 : vector<1x128x128xf32> to vector<128x128xf32>
    %cst_105 = arith.constant dense<0.000000e+00> : vector<64x128xf32>
    %103 = tpu.matmul %100, %102, %cst_105 {dimension_numbers = #tpu.dot_dimension_numbers<[1], [0], [0], [1], [0, 0, 1, 1], [], []>} : vector<64x128xf32>, vector<128x128xf32>, vector<64x128xf32> -> vector<64x128xf32>
    %104 = arith.addf %98, %103 : vector<64x128xf32>
    %c1_106 = arith.constant 1 : index
    %c1_107 = arith.constant 1 : index
    %c0_108 = arith.constant 0 : index
    %105 = vector.load %arg9[%c1_106, %c1_107, %c0_108] : memref<10x10x128xf32, #tpu.memory_space<vmem>>, vector<8x8x128xf32>
    %106 = vector.shape_cast %105 : vector<8x8x128xf32> to vector<64x128xf32>
    %c4_109 = arith.constant 4 : index
    %c0_110 = arith.constant 0 : index
    %c0_111 = arith.constant 0 : index
    %107 = vector.load %arg4[%c4_109, %c0_110, %c0_111] : memref<9x128x128xf32, #tpu.memory_space<vmem>>, vector<1x128x128xf32>
    %108 = vector.shape_cast %107 : vector<1x128x128xf32> to vector<128x128xf32>
    %cst_112 = arith.constant dense<0.000000e+00> : vector<64x128xf32>
    %109 = tpu.matmul %106, %108, %cst_112 {dimension_numbers = #tpu.dot_dimension_numbers<[1], [0], [0], [1], [0, 0, 1, 1], [], []>} : vector<64x128xf32>, vector<128x128xf32>, vector<64x128xf32> -> vector<64x128xf32>
    %110 = arith.addf %104, %109 : vector<64x128xf32>
    %c1_113 = arith.constant 1 : index
    %c2_114 = arith.constant 2 : index
    %c0_115 = arith.constant 0 : index
    %111 = vector.load %arg9[%c1_113, %c2_114, %c0_115] : memref<10x10x128xf32, #tpu.memory_space<vmem>>, vector<8x8x128xf32>
    %112 = vector.shape_cast %111 : vector<8x8x128xf32> to vector<64x128xf32>
    %c5_116 = arith.constant 5 : index
    %c0_117 = arith.constant 0 : index
    %c0_118 = arith.constant 0 : index
    %113 = vector.load %arg4[%c5_116, %c0_117, %c0_118] : memref<9x128x128xf32, #tpu.memory_space<vmem>>, vector<1x128x128xf32>
    %114 = vector.shape_cast %113 : vector<1x128x128xf32> to vector<128x128xf32>
    %cst_119 = arith.constant dense<0.000000e+00> : vector<64x128xf32>
    %115 = tpu.matmul %112, %114, %cst_119 {dimension_numbers = #tpu.dot_dimension_numbers<[1], [0], [0], [1], [0, 0, 1, 1], [], []>} : vector<64x128xf32>, vector<128x128xf32>, vector<64x128xf32> -> vector<64x128xf32>
    %116 = arith.addf %110, %115 : vector<64x128xf32>
    %c2_120 = arith.constant 2 : index
    %c0_121 = arith.constant 0 : index
    %c0_122 = arith.constant 0 : index
    %117 = vector.load %arg9[%c2_120, %c0_121, %c0_122] : memref<10x10x128xf32, #tpu.memory_space<vmem>>, vector<8x8x128xf32>
    %118 = vector.shape_cast %117 : vector<8x8x128xf32> to vector<64x128xf32>
    %c6_123 = arith.constant 6 : index
    %c0_124 = arith.constant 0 : index
    %c0_125 = arith.constant 0 : index
    %119 = vector.load %arg4[%c6_123, %c0_124, %c0_125] : memref<9x128x128xf32, #tpu.memory_space<vmem>>, vector<1x128x128xf32>
    %120 = vector.shape_cast %119 : vector<1x128x128xf32> to vector<128x128xf32>
    %cst_126 = arith.constant dense<0.000000e+00> : vector<64x128xf32>
    %121 = tpu.matmul %118, %120, %cst_126 {dimension_numbers = #tpu.dot_dimension_numbers<[1], [0], [0], [1], [0, 0, 1, 1], [], []>} : vector<64x128xf32>, vector<128x128xf32>, vector<64x128xf32> -> vector<64x128xf32>
    %122 = arith.addf %116, %121 : vector<64x128xf32>
    %c2_127 = arith.constant 2 : index
    %c1_128 = arith.constant 1 : index
    %c0_129 = arith.constant 0 : index
    %123 = vector.load %arg9[%c2_127, %c1_128, %c0_129] : memref<10x10x128xf32, #tpu.memory_space<vmem>>, vector<8x8x128xf32>
    %124 = vector.shape_cast %123 : vector<8x8x128xf32> to vector<64x128xf32>
    %c7_130 = arith.constant 7 : index
    %c0_131 = arith.constant 0 : index
    %c0_132 = arith.constant 0 : index
    %125 = vector.load %arg4[%c7_130, %c0_131, %c0_132] : memref<9x128x128xf32, #tpu.memory_space<vmem>>, vector<1x128x128xf32>
    %126 = vector.shape_cast %125 : vector<1x128x128xf32> to vector<128x128xf32>
    %cst_133 = arith.constant dense<0.000000e+00> : vector<64x128xf32>
    %127 = tpu.matmul %124, %126, %cst_133 {dimension_numbers = #tpu.dot_dimension_numbers<[1], [0], [0], [1], [0, 0, 1, 1], [], []>} : vector<64x128xf32>, vector<128x128xf32>, vector<64x128xf32> -> vector<64x128xf32>
    %128 = arith.addf %122, %127 : vector<64x128xf32>
    %c2_134 = arith.constant 2 : index
    %c2_135 = arith.constant 2 : index
    %c0_136 = arith.constant 0 : index
    %129 = vector.load %arg9[%c2_134, %c2_135, %c0_136] : memref<10x10x128xf32, #tpu.memory_space<vmem>>, vector<8x8x128xf32>
    %130 = vector.shape_cast %129 : vector<8x8x128xf32> to vector<64x128xf32>
    %c8_137 = arith.constant 8 : index
    %c0_138 = arith.constant 0 : index
    %c0_139 = arith.constant 0 : index
    %131 = vector.load %arg4[%c8_137, %c0_138, %c0_139] : memref<9x128x128xf32, #tpu.memory_space<vmem>>, vector<1x128x128xf32>
    %132 = vector.shape_cast %131 : vector<1x128x128xf32> to vector<128x128xf32>
    %cst_140 = arith.constant dense<0.000000e+00> : vector<64x128xf32>
    %133 = tpu.matmul %130, %132, %cst_140 {dimension_numbers = #tpu.dot_dimension_numbers<[1], [0], [0], [1], [0, 0, 1, 1], [], []>} : vector<64x128xf32>, vector<128x128xf32>, vector<64x128xf32> -> vector<64x128xf32>
    %134 = arith.addf %128, %133 : vector<64x128xf32>
    %c0_141 = arith.constant 0 : index
    %c0_142 = arith.constant 0 : index
    %135 = vector.load %arg5[%c0_141, %c0_142] : memref<1x128xf32, #tpu.memory_space<vmem>>, vector<1x128xf32>
    %136 = vector.broadcast %135 : vector<1x128xf32> to vector<64x128xf32>
    %137 = arith.addf %134, %136 : vector<64x128xf32>
    %cst_143 = arith.constant 0.000000e+00 : f32
    %138 = vector.broadcast %cst_143 : f32 to vector<64x128xf32>
    %139 = arith.maximumf %137, %138 : vector<64x128xf32>
    %140 = vector.shape_cast %139 : vector<64x128xf32> to vector<8x8x128xf32>
    %c0_144 = arith.constant 0 : index
    %c0_145 = arith.constant 0 : index
    %c0_146 = arith.constant 0 : index
    %c0_147 = arith.constant 0 : index
    %141 = vector.load %arg8[%c0_144, %c0_145, %c0_146, %c0_147] : memref<1x8x8x128xf32, #tpu.memory_space<vmem>>, vector<1x8x8x128xf32>
    %142 = vector.shape_cast %141 : vector<1x8x8x128xf32> to vector<8x8x128xf32>
    %143 = vector.shape_cast %140 : vector<8x8x128xf32> to vector<1x8x8x128xf32>
    tpu.vector_store %arg8[%c0_144, %c0_145, %c0_146, %c0_147], %143 {strides = array<i32>} : memref<1x8x8x128xf32, #tpu.memory_space<vmem>>, vector<1x8x8x128xf32>,
    return
  }
  func.func @transform_0(%arg0: i32) -> (i32, i32, i32, i32) {
    %c0_i32 = arith.constant 0 : i32
    %c0_i32_0 = arith.constant 0 : i32
    %c0_i32_1 = arith.constant 0 : i32
    %c0_i32_2 = arith.constant 0 : i32
    return %arg0, %c0_i32, %c0_i32_0, %c0_i32_1 : i32, i32, i32, i32
  }
  func.func @transform_1(%arg0: i32) -> (i32, i32, i32) {
    %c0_i32 = arith.constant 0 : i32
    %c0_i32_0 = arith.constant 0 : i32
    %c0_i32_1 = arith.constant 0 : i32
    %c0_i32_2 = arith.constant 0 : i32
    return %c0_i32, %c0_i32_0, %c0_i32_1 : i32, i32, i32
  }
  func.func @transform_2(%arg0: i32) -> (i32, i32) {
    %c0_i32 = arith.constant 0 : i32
    %c0_i32_0 = arith.constant 0 : i32
    %c0_i32_1 = arith.constant 0 : i32
    return %c0_i32, %c0_i32_0 : i32, i32
  }
  func.func @transform_3(%arg0: i32) -> (i32, i32, i32) {
    %c0_i32 = arith.constant 0 : i32
    %c0_i32_0 = arith.constant 0 : i32
    %c0_i32_1 = arith.constant 0 : i32
    %c0_i32_2 = arith.constant 0 : i32
    return %c0_i32, %c0_i32_0, %c0_i32_1 : i32, i32, i32
  }
  func.func @transform_4(%arg0: i32) -> (i32, i32) {
    %c0_i32 = arith.constant 0 : i32
    %c0_i32_0 = arith.constant 0 : i32
    %c0_i32_1 = arith.constant 0 : i32
    return %c0_i32, %c0_i32_0 : i32, i32
  }
  func.func @transform_5(%arg0: i32) -> (i32, i32) {
    %c0_i32 = arith.constant 0 : i32
    %c0_i32_0 = arith.constant 0 : i32
    %c0_i32_1 = arith.constant 0 : i32
    return %c0_i32, %c0_i32_0 : i32, i32
  }
  func.func @transform_6(%arg0: i32) -> (i32, i32) {
    %c0_i32 = arith.constant 0 : i32
    %c0_i32_0 = arith.constant 0 : i32
    %c0_i32_1 = arith.constant 0 : i32
    return %c0_i32, %c0_i32_0 : i32, i32
  }
  func.func @transform_7(%arg0: i32) -> (i32, i32, i32, i32) {
    %c0_i32 = arith.constant 0 : i32
    %c0_i32_0 = arith.constant 0 : i32
    %c0_i32_1 = arith.constant 0 : i32
    %c0_i32_2 = arith.constant 0 : i32
    return %arg0, %c0_i32, %c0_i32_0, %c0_i32_1 : i32, i32, i32, i32
  }
}

</mosaic_0001>

<llo_original>
// kernel: tpu_custom_call.1
$region0: #{tpu_custom_call.1}
  #allocation0 [shape = 'u32[]', space=smem, size = 0x4, offset = 0x4, fixed_abs, tag = 'smem constant byte address 0x4 - core index']
  #allocation1 [shape = 'u32[72,128]{1,0:T(1,128)}', space=vmem, size = 0x9000, scoped, tag = 'internal scratch']
  #allocation2 [shape = 'f32[10,10,128]{2,1,0:T(8,128)}', space=vmem, size = 0x14000, scoped, tag = 'scratch operand']
  %s0 = inlined_call_operand.vmem [shape: f32[2,36,9,4], index: 0, kind: input, shape index: {}]
  %s1 = inlined_call_operand.vmem [shape: f32[9,4,128], index: 1, kind: input, shape index: {}]
  %s2 = inlined_call_operand.vmem [shape: f32[1,128], index: 2, kind: input, shape index: {}]
  %s3 = inlined_call_operand.vmem [shape: f32[9,128,128], index: 3, kind: input, shape index: {}]
  %s4 = inlined_call_operand.vmem [shape: f32[1,128], index: 4, kind: input, shape index: {}]
  %s5 = inlined_call_operand.vmem [shape: f32[4,128], index: 5, kind: input, shape index: {}]
  %s6 = inlined_call_operand.vmem [shape: f32[1,128], index: 6, kind: input, shape index: {}]
  %s7 = inlined_call_operand.hbm [shape: f32[2,8,8,128], index: 7, kind: output, shape index: {}]
  %s8 = sld [smem:[#allocation0]]
  $region61: #{tpu_custom_call.1} parent=0
    _
  %s10 = ssub.s32 1, %s8
  %s11 = scalar_select 0, %s10, %s8
  $region1: #{tpu_custom_call.1} parent=0
    #allocation3 [shape = 'u8[65536]{0}', space=vmem, size = 0x10000, scoped, tag = 'output window, operand 0']
    #allocation4 [shape = 's32[2]{0}', space=sflag, size = 0x8, scoped, tag = 'scoped memory for tpu_custom_call.1']
    %12 = vsyncpa [#allocation4], 0
    %s13 = scalar_lea.sflag [#allocation4], 1
    %14 = vsyncpa %s13, 0
    loop: start=0, step=1, limit=4
    $region2: #{tpu_custom_call.1} parent=1 // loop_pre_header
      _
    $region3: #{tpu_custom_call.1} parent=1 // loop_header
      %s16 = sphi 0, %s20
      %p17 = scmp.ge.s32.totalorder %s16, 4
      %s26 = sphi 0, %s28
      %s29 = sphi 0, %s26
      %s30 = sphi 0, %s29
      %s46 = sphi 0, %s30
      %s50 = sphi 0, %s50
      %s52 = sphi 0, %s50
      %s53 = sphi 0, %s52
      %s67 = sphi 0, %s53
      %s71 = sphi 0, %s71
      %s73 = sphi 0, %s71
      %s74 = sphi 0, %s73
      %s88 = sphi 0, %s74
      %s92 = sphi 0, %s92
      %s94 = sphi 0, %s92
      %s95 = sphi 0, %s94
      %s109 = sphi 0, %s95
      %s113 = sphi 0, %s113
      %s115 = sphi 0, %s113
      %s116 = sphi 0, %s115
      %s130 = sphi 0, %s116
      %s134 = sphi 0, %s134
      %s136 = sphi 0, %s134
      %s137 = sphi 0, %s136
      %s151 = sphi 0, %s137
      %s155 = sphi 0, %s155
      %s157 = sphi 0, %s155
      %s158 = sphi 0, %s157
      %s172 = sphi 0, %s158
      %s178 = sphi 0, %s180
      %s181 = sphi 0, %s178
      %s182 = sphi 0, %s181
      %s198 = sphi 0, %s182
    $region4: #{tpu_custom_call.1} parent=1 // loop_header_branch
      %19 = sbr.rel (%p17) target = $region8
    $region5: #{tpu_custom_call.1} parent=1 // loop_body
      %s21 = ssub.s32 %s16, 1
      %s22 = ssub.s32 %s16, 2
      %s23 = sadd.s32 %s16, 1
      %s24 = ssub.s32 %s16, %s23
      %p25 = scmp.eq.s32.totalorder %s24, 0
      %s27 = sadd.s32 %s26, 1
      %s28 = scalar_select %p25, %s26, %s27
      %p31 = pneg %p25
      %p32 = scmp.eq.s32.totalorder %s16, 1
      %p33 = por %p31, %p32
      %p34 = scmp.ne.s32.totalorder %s26, %s29
      %p35 = scmp.eq.s32.totalorder %s16, 0
      %p36 = por %p34, %p35
      %p37 = scmp.ne.s32.totalorder %s26, %s29
      %p38 = scmp.eq.s32.totalorder %s21, 1
      %p39 = por %p37, %p38
      %p40 = scmp.ne.s32.totalorder %s29, %s30
      %p41 = scmp.eq.s32.totalorder %s21, 0
      %p42 = por %p40, %p41
      %p43 = scmp.ne.s32.totalorder %s29, %s30
      %p44 = scmp.eq.s32.totalorder %s22, 1
      %p45 = por %p43, %p44
      %p47 = scmp.ne.s32.totalorder %s30, %s46
      %p48 = scmp.eq.s32.totalorder %s22, 0
      %p49 = por %p47, %p48
      %s51 = sadd.s32 %s50, 1
      %p54 = scmp.eq.s32.totalorder %s16, 1
      %p55 = scmp.ne.s32.totalorder %s50, %s52
      %p56 = scmp.eq.s32.totalorder %s16, 0
      %p57 = por %p55, %p56
      %p58 = scmp.ne.s32.totalorder %s50, %s52
      %p59 = scmp.eq.s32.totalorder %s21, 1
      %p60 = por %p58, %p59
      %p61 = scmp.ne.s32.totalorder %s52, %s53
      %p62 = scmp.eq.s32.totalorder %s21, 0
      %p63 = por %p61, %p62
      %p64 = scmp.ne.s32.totalorder %s52, %s53
      %p65 = scmp.eq.s32.totalorder %s22, 1
      %p66 = por %p64, %p65
      %p68 = scmp.ne.s32.totalorder %s53, %s67
      %p69 = scmp.eq.s32.totalorder %s22, 0
      %p70 = por %p68, %p69
      %s72 = sadd.s32 %s71, 1
      %p75 = scmp.eq.s32.totalorder %s16, 1
      %p76 = scmp.ne.s32.totalorder %s71, %s73
      %p77 = scmp.eq.s32.totalorder %s16, 0
      %p78 = por %p76, %p77
      %p79 = scmp.ne.s32.totalorder %s71, %s73
      %p80 = scmp.eq.s32.totalorder %s21, 1
      %p81 = por %p79, %p80
      %p82 = scmp.ne.s32.totalorder %s73, %s74
      %p83 = scmp.eq.s32.totalorder %s21, 0
      %p84 = por %p82, %p83
      %p85 = scmp.ne.s32.totalorder %s73, %s74
      %p86 = scmp.eq.s32.totalorder %s22, 1
      %p87 = por %p85, %p86
      %p89 = scmp.ne.s32.totalorder %s74, %s88
      %p90 = scmp.eq.s32.totalorder %s22, 0
      %p91 = por %p89, %p90
      %s93 = sadd.s32 %s92, 1
      %p96 = scmp.eq.s32.totalorder %s16, 1
      %p97 = scmp.ne.s32.totalorder %s92, %s94
      %p98 = scmp.eq.s32.totalorder %s16, 0
      %p99 = por %p97, %p98
      %p100 = scmp.ne.s32.totalorder %s92, %s94
      %p101 = scmp.eq.s32.totalorder %s21, 1
      %p102 = por %p100, %p101
      %p103 = scmp.ne.s32.totalorder %s94, %s95
      %p104 = scmp.eq.s32.totalorder %s21, 0
      %p105 = por %p103, %p104
      %p106 = scmp.ne.s32.totalorder %s94, %s95
      %p107 = scmp.eq.s32.totalorder %s22, 1
      %p108 = por %p106, %p107
      %p110 = scmp.ne.s32.totalorder %s95, %s109
      %p111 = scmp.eq.s32.totalorder %s22, 0
      %p112 = por %p110, %p111
      %s114 = sadd.s32 %s113, 1
      %p117 = scmp.eq.s32.totalorder %s16, 1
      %p118 = scmp.ne.s32.totalorder %s113, %s115
      %p119 = scmp.eq.s32.totalorder %s16, 0
      %p120 = por %p118, %p119
      %p121 = scmp.ne.s32.totalorder %s113, %s115
      %p122 = scmp.eq.s32.totalorder %s21, 1
      %p123 = por %p121, %p122
      %p124 = scmp.ne.s32.totalorder %s115, %s116
      %p125 = scmp.eq.s32.totalorder %s21, 0
      %p126 = por %p124, %p125
      %p127 = scmp.ne.s32.totalorder %s115, %s116
      %p128 = scmp.eq.s32.totalorder %s22, 1
      %p129 = por %p127, %p128
      %p131 = scmp.ne.s32.totalorder %s116, %s130
      %p132 = scmp.eq.s32.totalorder %s22, 0
      %p133 = por %p131, %p132
      %s135 = sadd.s32 %s134, 1
      %p138 = scmp.eq.s32.totalorder %s16, 1
      %p139 = scmp.ne.s32.totalorder %s134, %s136
      %p140 = scmp.eq.s32.totalorder %s16, 0
      %p141 = por %p139, %p140
      %p142 = scmp.ne.s32.totalorder %s134, %s136
      %p143 = scmp.eq.s32.totalorder %s21, 1
      %p144 = por %p142, %p143
      %p145 = scmp.ne.s32.totalorder %s136, %s137
      %p146 = scmp.eq.s32.totalorder %s21, 0
      %p147 = por %p145, %p146
      %p148 = scmp.ne.s32.totalorder %s136, %s137
      %p149 = scmp.eq.s32.totalorder %s22, 1
      %p150 = por %p148, %p149
      %p152 = scmp.ne.s32.totalorder %s137, %s151
      %p153 = scmp.eq.s32.totalorder %s22, 0
      %p154 = por %p152, %p153
      %s156 = sadd.s32 %s155, 1
      %p159 = scmp.eq.s32.totalorder %s16, 1
      %p160 = scmp.ne.s32.totalorder %s155, %s157
      %p161 = scmp.eq.s32.totalorder %s16, 0
      %p162 = por %p160, %p161
      %p163 = scmp.ne.s32.totalorder %s155, %s157
      %p164 = scmp.eq.s32.totalorder %s21, 1
      %p165 = por %p163, %p164
      %p166 = scmp.ne.s32.totalorder %s157, %s158
      %p167 = scmp.eq.s32.totalorder %s21, 0
      %p168 = por %p166, %p167
      %p169 = scmp.ne.s32.totalorder %s157, %s158
      %p170 = scmp.eq.s32.totalorder %s22, 1
      %p171 = por %p169, %p170
      %p173 = scmp.ne.s32.totalorder %s158, %s172
      %p174 = scmp.eq.s32.totalorder %s22, 0
      %p175 = por %p173, %p174
      %s176 = ssub.s32 %s16, %s23
      %p177 = scmp.eq.s32.totalorder %s176, 0
      %s179 = sadd.s32 %s178, 1
      %s180 = scalar_select %p177, %s178, %s179
      %p183 = pneg %p177
      %p184 = scmp.eq.s32.totalorder %s16, 1
      %p185 = por %p183, %p184
      %p186 = scmp.ne.s32.totalorder %s178, %s181
      %p187 = scmp.eq.s32.totalorder %s16, 0
      %p188 = por %p186, %p187
      %p189 = scmp.ne.s32.totalorder %s178, %s181
      %p190 = scmp.eq.s32.totalorder %s21, 1
      %p191 = por %p189, %p190
      %p192 = scmp.ne.s32.totalorder %s181, %s182
      %p193 = scmp.eq.s32.totalorder %s21, 0
      %p194 = por %p192, %p193
      %p195 = scmp.ne.s32.totalorder %s181, %s182
      %p196 = scmp.eq.s32.totalorder %s22, 1
      %p197 = por %p195, %p196
      %p199 = scmp.ne.s32.totalorder %s182, %s198
      %p200 = scmp.eq.s32.totalorder %s22, 0
      %p201 = por %p199, %p200
      %p202 = scmp.le.s32.totalorder 1, %s16
      %p203 = scmp.lt.s32.totalorder %s16, 3
      %p204 = pnand %p202, %p203
      %p205 = pneg %p204
      // Predicated region
      $region9: #{tpu_custom_call.1} parent=5 // pred_check
        _
      $region10: #{tpu_custom_call.1} parent=5 // pred_check_branch
        %207 = sbr.rel (%p204) target = $region12
      $region11: #{tpu_custom_call.1} parent=5 // pred_region
        %s208 = ssub.s32 %s16, 1
        // Predicated region
        $region13: #{tpu_custom_call.1} parent=11 // pred_check
          %p209 = pneg %p63
        $region14: #{tpu_custom_call.1} parent=11 // pred_check_branch
          %211 = sbr.rel (%p209) target = $region16
        $region15: #{tpu_custom_call.1} parent=11 // pred_region
          _
        $region16: #{tpu_custom_call.1} parent=11 // pred_fallthru
          _
        // Predicated region
        $region17: #{tpu_custom_call.1} parent=11 // pred_check
          %p212 = pneg %p84
        $region18: #{tpu_custom_call.1} parent=11 // pred_check_branch
          %214 = sbr.rel (%p212) target = $region20
        $region19: #{tpu_custom_call.1} parent=11 // pred_region
          _
        $region20: #{tpu_custom_call.1} parent=11 // pred_fallthru
          _
        // Predicated region
        $region21: #{tpu_custom_call.1} parent=11 // pred_check
          %p215 = pneg %p105
        $region22: #{tpu_custom_call.1} parent=11 // pred_check_branch
          %217 = sbr.rel (%p215) target = $region24
        $region23: #{tpu_custom_call.1} parent=11 // pred_region
          _
        $region24: #{tpu_custom_call.1} parent=11 // pred_fallthru
          _
        // Predicated region
        $region25: #{tpu_custom_call.1} parent=11 // pred_check
          %p218 = pneg %p126
        $region26: #{tpu_custom_call.1} parent=11 // pred_check_branch
          %220 = sbr.rel (%p218) target = $region28
        $region27: #{tpu_custom_call.1} parent=11 // pred_region
          _
        $region28: #{tpu_custom_call.1} parent=11 // pred_fallthru
          _
        // Predicated region
        $region29: #{tpu_custom_call.1} parent=11 // pred_check
          %p221 = pneg %p147
        $region30: #{tpu_custom_call.1} parent=11 // pred_check_branch
          %223 = sbr.rel (%p221) target = $region32
        $region31: #{tpu_custom_call.1} parent=11 // pred_region
          _
        $region32: #{tpu_custom_call.1} parent=11 // pred_fallthru
          _
        // Predicated region
        $region33: #{tpu_custom_call.1} parent=11 // pred_check
          %p224 = pneg %p168
        $region34: #{tpu_custom_call.1} parent=11 // pred_check_branch
          %226 = sbr.rel (%p224) target = $region36
        $region35: #{tpu_custom_call.1} parent=11 // pred_region
          _
        $region36: #{tpu_custom_call.1} parent=11 // pred_fallthru
          _
      $region12: #{tpu_custom_call.1} parent=5 // pred_fallthru
        _
      %p227 = scmp.lt.s32.totalorder %s16, 2
      // Predicated region
      $region37: #{tpu_custom_call.1} parent=5 // pred_check
        %p228 = pneg %p227
      $region38: #{tpu_custom_call.1} parent=5 // pred_check_branch
        %230 = sbr.rel (%p228) target = $region40
      $region39: #{tpu_custom_call.1} parent=5 // pred_region
        // Predicated region
        $region41: #{tpu_custom_call.1} parent=39 // pred_check
          %p231 = pneg %p36
        $region42: #{tpu_custom_call.1} parent=39 // pred_check_branch
          %233 = sbr.rel (%p231) target = $region44
        $region43: #{tpu_custom_call.1} parent=39 // pred_region
          %p234 = scmp.lt.s32.totalorder %s16, 1
          %s235 = scalar_select %p234, %s16, 1
          %s236 = smul.addr %s235, 72
          %s237 = smul.addr %s236, 8
          %s238 = scalar_lea.vmem %s0, %s237
        $region44: #{tpu_custom_call.1} parent=39 // pred_fallthru
          _
      $region40: #{tpu_custom_call.1} parent=5 // pred_fallthru
        _
      %p239 = scmp.le.s32.totalorder 1, %s16
      %p240 = scmp.lt.s32.totalorder %s16, 3
      %p241 = pnand %p239, %p240
      %p242 = pneg %p241
      // Predicated region
      $region45: #{tpu_custom_call.1} parent=5 // pred_check
        _
      $region46: #{tpu_custom_call.1} parent=5 // pred_check_branch
        %244 = sbr.rel (%p241) target = $region48
      $region47: #{tpu_custom_call.1} parent=5 // pred_region
        %s245 = ssub.s32 %s16, 1
        %p246 = scmp.lt.s32.totalorder %s21, 1
        %s247 = scalar_select %p246, %s21, 1
        %s248 = smul.addr %s247, 72
        %s249 = smul.addr %s248, 8
        %s250 = scalar_lea.vmem %s0, %s249
        %p251 = pneg %p42
        %p252 = pneg %p39
        %p253 = pneg %p63
        %p254 = pneg %p60
        %p255 = pneg %p84
        %p256 = pneg %p81
        %p257 = pneg %p105
        %p258 = pneg %p102
        %p259 = pneg %p126
        %p260 = pneg %p123
        %p261 = pneg %p147
        %p262 = pneg %p144
        %p263 = pneg %p168
        %p264 = pneg %p165
        %p265 = pneg %p194
        %p266 = pneg %p191
        %s267 = sand.u32 %s181, 1
        %s268 = scalar_lea.sflag [#allocation4], %s267
        %s269 = sand.u32 %s181, 1
        %s270 = smul.addr %s269, 64
        %s271 = scalar_lea.vmem [#allocation3], %s270
        %p272 = scmp.lt.s32.totalorder %s21, 1
        %s273 = scalar_select %p272, %s21, 1
        %s274 = smul.addr %s273, 72
        %s275 = smul.addr %s274, 8
        %s276 = scalar_lea.vmem %s0, %s275
        %v277 = vld [vmem:[%s276] sm:$0xff]
        %v278 = vld [vmem:[%s276 + $0x10] sm:$0xff]
        %v279 = vld [vmem:[%s276 + $0x20] sm:$0xff]
        %v280 = vld [vmem:[%s276 + $0x30] sm:$0xff]
        %v281 = vld [vmem:[%s276 + $0x40] sm:$0xff]
        %v282 = vld [vmem:[%s276 + $0x50] sm:$0xff]
        %v283 = vld [vmem:[%s276 + $0x60] sm:$0xff]
        %v284 = vld [vmem:[%s276 + $0x70] sm:$0xff]
        %v285 = vld [vmem:[%s1] sm:$0xf]
        %s286 = scalar_lea.vmem %s276, 144
        %v287 = vld [vmem:[%s286] sm:$0xff]
        %v288 = vld [vmem:[%s286 + $0x10] sm:$0xff]
        %v289 = vld [vmem:[%s286 + $0x20] sm:$0xff]
        %v290 = vld [vmem:[%s286 + $0x30] sm:$0xff]
        %v291 = vld [vmem:[%s286 + $0x40] sm:$0xff]
        %v292 = vld [vmem:[%s286 + $0x50] sm:$0xff]
        %v293 = vld [vmem:[%s286 + $0x60] sm:$0xff]
        %v294 = vld [vmem:[%s286 + $0x70] sm:$0xff]
        %s295 = scalar_lea.vmem %s1, 4
        %v296 = vld [vmem:[%s295] sm:$0xf]
        %vm297 = vcmask 31744
        %v299 = vsel %vm297, %v287, 0
        %v302 = vsel %vm297, %v288, 0
        %v305 = vsel %vm297, %v289, 0
        %v308 = vsel %vm297, %v290, 0
        %v311 = vsel %vm297, %v291, 0
        %v314 = vsel %vm297, %v292, 0
        %v317 = vsel %vm297, %v293, 0
        %v320 = vsel %vm297, %v294, 0
        %vm322 = vcmask 1043456
        %v324 = vsel %vm322, %v296, 0
        %326 = vmatpush.msra.mxu0 0.0
        %327 = vmatpush.msra.mxu0 0.0
        %328 = vmatpush.msra.mxu0 0.0
        %329 = vmatpush.msra.mxu0 0.0
        %330 = vmatpush.msra.mxu0 0.0
        %331 = vmatpush.msra.mxu0 0.0
        %332 = vmatpush.msra.mxu0 0.0
        %333 = vmatpush.msra.mxu0 0.0
        %334 = vmatpush.msra.mxu0 0.0
        %335 = vmatpush.msra.mxu0 0.0
        %336 = vmatpush.msra.mxu0 0.0
        %337 = vmatpush.msra.mxu0 0.0
        %338 = vmatpush.msra.mxu0 0.0
        %339 = vmatpush.msra.mxu0 0.0
        %340 = vmatpush.msra.mxu0 0.0
        %341 = vmatpush.msra.mxu0 %v324
        %342 = vmatmul.f32.gmra.mxu0 %v299
        %v343 = vpop.f32.mrf.mxu0
        %v344 = vadd.f32 0.0, %v343
        %345 = vmatmul.f32.gmra.mxu0 %v302
        %v346 = vpop.f32.mrf.mxu0
        %v347 = vadd.f32 0.0, %v346
        %348 = vmatmul.f32.gmra.mxu0 %v305
        %v349 = vpop.f32.mrf.mxu0
        %v350 = vadd.f32 0.0, %v349
        %351 = vmatmul.f32.gmra.mxu0 %v308
        %v352 = vpop.f32.mrf.mxu0
        %v353 = vadd.f32 0.0, %v352
        %354 = vmatmul.f32.gmra.mxu0 %v311
        %v355 = vpop.f32.mrf.mxu0
        %v356 = vadd.f32 0.0, %v355
        %357 = vmatmul.f32.gmra.mxu0 %v314
        %v358 = vpop.f32.mrf.mxu0
        %v359 = vadd.f32 0.0, %v358
        %360 = vmatmul.f32.gmra.mxu0 %v317
        %v361 = vpop.f32.mrf.mxu0
        %v362 = vadd.f32 0.0, %v361
        %363 = vmatmul.f32.gmra.mxu0 %v320
        %v364 = vpop.f32.mrf.mxu0
        %v365 = vadd.f32 0.0, %v364
        %366 = vdwg.mxu0
        %v368 = vsel %vm297, %v277, 0
        %v371 = vsel %vm297, %v278, 0
        %v374 = vsel %vm297, %v279, 0
        %v377 = vsel %vm297, %v280, 0
        %v380 = vsel %vm297, %v281, 0
        %v383 = vsel %vm297, %v282, 0
        %v386 = vsel %vm297, %v283, 0
        %v389 = vsel %vm297, %v284, 0
        %v392 = vsel %vm322, %v285, 0
        %394 = vmatpush.msra.mxu0 0.0
        %395 = vmatpush.msra.mxu0 0.0
        %396 = vmatpush.msra.mxu0 0.0
        %397 = vmatpush.msra.mxu0 0.0
        %398 = vmatpush.msra.mxu0 0.0
        %399 = vmatpush.msra.mxu0 0.0
        %400 = vmatpush.msra.mxu0 0.0
        %401 = vmatpush.msra.mxu0 0.0
        %402 = vmatpush.msra.mxu0 0.0
        %403 = vmatpush.msra.mxu0 0.0
        %404 = vmatpush.msra.mxu0 0.0
        %405 = vmatpush.msra.mxu0 0.0
        %406 = vmatpush.msra.mxu0 0.0
        %407 = vmatpush.msra.mxu0 0.0
        %408 = vmatpush.msra.mxu0 0.0
        %409 = vmatpush.msra.mxu0 %v392
        %410 = vmatmul.f32.gmra.mxu0 %v368
        %v411 = vpop.f32.mrf.mxu0
        %v412 = vadd.f32 %v344, %v411
        %413 = vmatmul.f32.gmra.mxu0 %v371
        %v414 = vpop.f32.mrf.mxu0
        %v415 = vadd.f32 %v347, %v414
        %416 = vmatmul.f32.gmra.mxu0 %v374
        %v417 = vpop.f32.mrf.mxu0
        %v418 = vadd.f32 %v350, %v417
        %419 = vmatmul.f32.gmra.mxu0 %v377
        %v420 = vpop.f32.mrf.mxu0
        %v421 = vadd.f32 %v353, %v420
        %422 = vmatmul.f32.gmra.mxu0 %v380
        %v423 = vpop.f32.mrf.mxu0
        %v424 = vadd.f32 %v356, %v423
        %425 = vmatmul.f32.gmra.mxu0 %v383
        %v426 = vpop.f32.mrf.mxu0
        %v427 = vadd.f32 %v359, %v426
        %428 = vmatmul.f32.gmra.mxu0 %v386
        %v429 = vpop.f32.mrf.mxu0
        %v430 = vadd.f32 %v362, %v429
        %431 = vmatmul.f32.gmra.mxu0 %v389
        %v432 = vpop.f32.mrf.mxu0
        %v433 = vadd.f32 %v365, %v432
        %434 = vdwg.mxu0
        %v435 = vld [vmem:[%s276 + $0x1] sm:$0xff]
        %v436 = vld [vmem:[%s276 + $0x11] sm:$0xff]
        %v437 = vld [vmem:[%s276 + $0x21] sm:$0xff]
        %v438 = vld [vmem:[%s276 + $0x31] sm:$0xff]
        %v439 = vld [vmem:[%s276 + $0x41] sm:$0xff]
        %v440 = vld [vmem:[%s276 + $0x51] sm:$0xff]
        %v441 = vld [vmem:[%s276 + $0x61] sm:$0xff]
        %v442 = vld [vmem:[%s276 + $0x71] sm:$0xff]
        %s443 = scalar_lea.vmem %s1, 8
        %v444 = vld [vmem:[%s443] sm:$0xf]
        %v446 = vsel %vm297, %v435, 0
        %v449 = vsel %vm297, %v436, 0
        %v452 = vsel %vm297, %v437, 0
        %v455 = vsel %vm297, %v438, 0
        %v458 = vsel %vm297, %v439, 0
        %v461 = vsel %vm297, %v440, 0
        %v464 = vsel %vm297, %v441, 0
        %v467 = vsel %vm297, %v442, 0
        %v470 = vsel %vm322, %v444, 0
        %472 = vmatpush.msra.mxu0 0.0
        %473 = vmatpush.msra.mxu0 0.0
        %474 = vmatpush.msra.mxu0 0.0
        %475 = vmatpush.msra.mxu0 0.0
        %476 = vmatpush.msra.mxu0 0.0
        %477 = vmatpush.msra.mxu0 0.0
        %478 = vmatpush.msra.mxu0 0.0
        %479 = vmatpush.msra.mxu0 0.0
        %480 = vmatpush.msra.mxu0 0.0
        %481 = vmatpush.msra.mxu0 0.0
        %482 = vmatpush.msra.mxu0 0.0
        %483 = vmatpush.msra.mxu0 0.0
        %484 = vmatpush.msra.mxu0 0.0
        %485 = vmatpush.msra.mxu0 0.0
        %486 = vmatpush.msra.mxu0 0.0
        %487 = vmatpush.msra.mxu0 %v470
        %488 = vmatmul.f32.gmra.mxu0 %v446
        %v489 = vpop.f32.mrf.mxu0
        %v490 = vadd.f32 0.0, %v489
        %491 = vmatmul.f32.gmra.mxu0 %v449
        %v492 = vpop.f32.mrf.mxu0
        %v493 = vadd.f32 0.0, %v492
        %494 = vmatmul.f32.gmra.mxu0 %v452
        %v495 = vpop.f32.mrf.mxu0
        %v496 = vadd.f32 0.0, %v495
        %497 = vmatmul.f32.gmra.mxu0 %v455
        %v498 = vpop.f32.mrf.mxu0
        %v499 = vadd.f32 0.0, %v498
        %500 = vmatmul.f32.gmra.mxu0 %v458
        %v501 = vpop.f32.mrf.mxu0
        %v502 = vadd.f32 0.0, %v501
        %503 = vmatmul.f32.gmra.mxu0 %v461
        %v504 = vpop.f32.mrf.mxu0
        %v505 = vadd.f32 0.0, %v504
        %506 = vmatmul.f32.gmra.mxu0 %v464
        %v507 = vpop.f32.mrf.mxu0
        %v508 = vadd.f32 0.0, %v507
        %509 = vmatmul.f32.gmra.mxu0 %v467
        %v510 = vpop.f32.mrf.mxu0
        %v511 = vadd.f32 0.0, %v510
        %512 = vdwg.mxu0
        %v513 = vadd.f32 %v412, %v490
        %v514 = vadd.f32 %v415, %v493
        %v515 = vadd.f32 %v418, %v496
        %v516 = vadd.f32 %v421, %v499
        %v517 = vadd.f32 %v424, %v502
        %v518 = vadd.f32 %v427, %v505
        %v519 = vadd.f32 %v430, %v508
        %v520 = vadd.f32 %v433, %v511
        %s521 = scalar_lea.vmem %s276, 288
        %v522 = vld [vmem:[%s521] sm:$0xff]
        %v523 = vld [vmem:[%s521 + $0x10] sm:$0xff]
        %v524 = vld [vmem:[%s521 + $0x20] sm:$0xff]
        %v525 = vld [vmem:[%s521 + $0x30] sm:$0xff]
        %v526 = vld [vmem:[%s521 + $0x40] sm:$0xff]
        %v527 = vld [vmem:[%s521 + $0x50] sm:$0xff]
        %v528 = vld [vmem:[%s521 + $0x60] sm:$0xff]
        %v529 = vld [vmem:[%s521 + $0x70] sm:$0xff]
        %s530 = scalar_lea.vmem %s1, 12
        %v531 = vld [vmem:[%s530] sm:$0xf]
        %v533 = vsel %vm297, %v522, 0
        %v536 = vsel %vm297, %v523, 0
        %v539 = vsel %vm297, %v524, 0
        %v542 = vsel %vm297, %v525, 0
        %v545 = vsel %vm297, %v526, 0
        %v548 = vsel %vm297, %v527, 0
        %v551 = vsel %vm297, %v528, 0
        %v554 = vsel %vm297, %v529, 0
        %v557 = vsel %vm322, %v531, 0
        %559 = vmatpush.msra.mxu0 0.0
        %560 = vmatpush.msra.mxu0 0.0
        %561 = vmatpush.msra.mxu0 0.0
        %562 = vmatpush.msra.mxu0 0.0
        %563 = vmatpush.msra.mxu0 0.0
        %564 = vmatpush.msra.mxu0 0.0
        %565 = vmatpush.msra.mxu0 0.0
        %566 = vmatpush.msra.mxu0 0.0
        %567 = vmatpush.msra.mxu0 0.0
        %568 = vmatpush.msra.mxu0 0.0
        %569 = vmatpush.msra.mxu0 0.0
        %570 = vmatpush.msra.mxu0 0.0
        %571 = vmatpush.msra.mxu0 0.0
        %572 = vmatpush.msra.mxu0 0.0
        %573 = vmatpush.msra.mxu0 0.0
        %574 = vmatpush.msra.mxu0 %v557
        %575 = vmatmul.f32.gmra.mxu0 %v533
        %v576 = vpop.f32.mrf.mxu0
        %v577 = vadd.f32 0.0, %v576
        %578 = vmatmul.f32.gmra.mxu0 %v536
        %v579 = vpop.f32.mrf.mxu0
        %v580 = vadd.f32 0.0, %v579
        %581 = vmatmul.f32.gmra.mxu0 %v539
        %v582 = vpop.f32.mrf.mxu0
        %v583 = vadd.f32 0.0, %v582
        %584 = vmatmul.f32.gmra.mxu0 %v542
        %v585 = vpop.f32.mrf.mxu0
        %v586 = vadd.f32 0.0, %v585
        %587 = vmatmul.f32.gmra.mxu0 %v545
        %v588 = vpop.f32.mrf.mxu0
        %v589 = vadd.f32 0.0, %v588
        %590 = vmatmul.f32.gmra.mxu0 %v548
        %v591 = vpop.f32.mrf.mxu0
        %v592 = vadd.f32 0.0, %v591
        %593 = vmatmul.f32.gmra.mxu0 %v551
        %v594 = vpop.f32.mrf.mxu0
        %v595 = vadd.f32 0.0, %v594
        %596 = vmatmul.f32.gmra.mxu0 %v554
        %v597 = vpop.f32.mrf.mxu0
        %v598 = vadd.f32 0.0, %v597
        %599 = vdwg.mxu0
        %v600 = vadd.f32 %v513, %v577
        %v601 = vadd.f32 %v514, %v580
        %v602 = vadd.f32 %v515, %v583
        %v603 = vadd.f32 %v516, %v586
        %v604 = vadd.f32 %v517, %v589
        %v605 = vadd.f32 %v518, %v592
        %v606 = vadd.f32 %v519, %v595
        %v607 = vadd.f32 %v520, %v598
        %s608 = scalar_lea.vmem %s276, 432
        %v609 = vld [vmem:[%s608] sm:$0xff]
        %v610 = vld [vmem:[%s608 + $0x10] sm:$0xff]
        %v611 = vld [vmem:[%s608 + $0x20] sm:$0xff]
        %v612 = vld [vmem:[%s608 + $0x30] sm:$0xff]
        %v613 = vld [vmem:[%s608 + $0x40] sm:$0xff]
        %v614 = vld [vmem:[%s608 + $0x50] sm:$0xff]
        %v615 = vld [vmem:[%s608 + $0x60] sm:$0xff]
        %v616 = vld [vmem:[%s608 + $0x70] sm:$0xff]
        %s617 = scalar_lea.vmem %s1, 16
        %v618 = vld [vmem:[%s617] sm:$0xf]
        %v620 = vsel %vm297, %v609, 0
        %v623 = vsel %vm297, %v610, 0
        %v626 = vsel %vm297, %v611, 0
        %v629 = vsel %vm297, %v612, 0
        %v632 = vsel %vm297, %v613, 0
        %v635 = vsel %vm297, %v614, 0
        %v638 = vsel %vm297, %v615, 0
        %v641 = vsel %vm297, %v616, 0
        %v644 = vsel %vm322, %v618, 0
        %646 = vmatpush.msra.mxu0 0.0
        %647 = vmatpush.msra.mxu0 0.0
        %648 = vmatpush.msra.mxu0 0.0
        %649 = vmatpush.msra.mxu0 0.0
        %650 = vmatpush.msra.mxu0 0.0
        %651 = vmatpush.msra.mxu0 0.0
        %652 = vmatpush.msra.mxu0 0.0
        %653 = vmatpush.msra.mxu0 0.0
        %654 = vmatpush.msra.mxu0 0.0
        %655 = vmatpush.msra.mxu0 0.0
        %656 = vmatpush.msra.mxu0 0.0
        %657 = vmatpush.msra.mxu0 0.0
        %658 = vmatpush.msra.mxu0 0.0
        %659 = vmatpush.msra.mxu0 0.0
        %660 = vmatpush.msra.mxu0 0.0
        %661 = vmatpush.msra.mxu0 %v644
        %662 = vmatmul.f32.gmra.mxu0 %v620
        %v663 = vpop.f32.mrf.mxu0
        %v664 = vadd.f32 0.0, %v663
        %665 = vmatmul.f32.gmra.mxu0 %v623
        %v666 = vpop.f32.mrf.mxu0
        %v667 = vadd.f32 0.0, %v666
        %668 = vmatmul.f32.gmra.mxu0 %v626
        %v669 = vpop.f32.mrf.mxu0
        %v670 = vadd.f32 0.0, %v669
        %671 = vmatmul.f32.gmra.mxu0 %v629
        %v672 = vpop.f32.mrf.mxu0
        %v673 = vadd.f32 0.0, %v672
        %674 = vmatmul.f32.gmra.mxu0 %v632
        %v675 = vpop.f32.mrf.mxu0
        %v676 = vadd.f32 0.0, %v675
        %677 = vmatmul.f32.gmra.mxu0 %v635
        %v678 = vpop.f32.mrf.mxu0
        %v679 = vadd.f32 0.0, %v678
        %680 = vmatmul.f32.gmra.mxu0 %v638
        %v681 = vpop.f32.mrf.mxu0
        %v682 = vadd.f32 0.0, %v681
        %683 = vmatmul.f32.gmra.mxu0 %v641
        %v684 = vpop.f32.mrf.mxu0
        %v685 = vadd.f32 0.0, %v684
        %686 = vdwg.mxu0
        %v687 = vadd.f32 %v600, %v664
        %v688 = vadd.f32 %v601, %v667
        %v689 = vadd.f32 %v602, %v670
        %v690 = vadd.f32 %v603, %v673
        %v691 = vadd.f32 %v604, %v676
        %v692 = vadd.f32 %v605, %v679
        %v693 = vadd.f32 %v606, %v682
        %v694 = vadd.f32 %v607, %v685
        %v695 = vld [vmem:[%s521 + $0x1] sm:$0xff]
        %v696 = vld [vmem:[%s521 + $0x11] sm:$0xff]
        %v697 = vld [vmem:[%s521 + $0x21] sm:$0xff]
        %v698 = vld [vmem:[%s521 + $0x31] sm:$0xff]
        %v699 = vld [vmem:[%s521 + $0x41] sm:$0xff]
        %v700 = vld [vmem:[%s521 + $0x51] sm:$0xff]
        %v701 = vld [vmem:[%s521 + $0x61] sm:$0xff]
        %v702 = vld [vmem:[%s521 + $0x71] sm:$0xff]
        %s703 = scalar_lea.vmem %s1, 20
        %v704 = vld [vmem:[%s703] sm:$0xf]
        %v706 = vsel %vm297, %v695, 0
        %v709 = vsel %vm297, %v696, 0
        %v712 = vsel %vm297, %v697, 0
        %v715 = vsel %vm297, %v698, 0
        %v718 = vsel %vm297, %v699, 0
        %v721 = vsel %vm297, %v700, 0
        %v724 = vsel %vm297, %v701, 0
        %v727 = vsel %vm297, %v702, 0
        %v730 = vsel %vm322, %v704, 0
        %732 = vmatpush.msra.mxu0 0.0
        %733 = vmatpush.msra.mxu0 0.0
        %734 = vmatpush.msra.mxu0 0.0
        %735 = vmatpush.msra.mxu0 0.0
        %736 = vmatpush.msra.mxu0 0.0
        %737 = vmatpush.msra.mxu0 0.0
        %738 = vmatpush.msra.mxu0 0.0
        %739 = vmatpush.msra.mxu0 0.0
        %740 = vmatpush.msra.mxu0 0.0
        %741 = vmatpush.msra.mxu0 0.0
        %742 = vmatpush.msra.mxu0 0.0
        %743 = vmatpush.msra.mxu0 0.0
        %744 = vmatpush.msra.mxu0 0.0
        %745 = vmatpush.msra.mxu0 0.0
        %746 = vmatpush.msra.mxu0 0.0
        %747 = vmatpush.msra.mxu0 %v730
        %748 = vmatmul.f32.gmra.mxu0 %v706
        %v749 = vpop.f32.mrf.mxu0
        %v750 = vadd.f32 0.0, %v749
        %751 = vmatmul.f32.gmra.mxu0 %v709
        %v752 = vpop.f32.mrf.mxu0
        %v753 = vadd.f32 0.0, %v752
        %754 = vmatmul.f32.gmra.mxu0 %v712
        %v755 = vpop.f32.mrf.mxu0
        %v756 = vadd.f32 0.0, %v755
        %757 = vmatmul.f32.gmra.mxu0 %v715
        %v758 = vpop.f32.mrf.mxu0
        %v759 = vadd.f32 0.0, %v758
        %760 = vmatmul.f32.gmra.mxu0 %v718
        %v761 = vpop.f32.mrf.mxu0
        %v762 = vadd.f32 0.0, %v761
        %763 = vmatmul.f32.gmra.mxu0 %v721
        %v764 = vpop.f32.mrf.mxu0
        %v765 = vadd.f32 0.0, %v764
        %766 = vmatmul.f32.gmra.mxu0 %v724
        %v767 = vpop.f32.mrf.mxu0
        %v768 = vadd.f32 0.0, %v767
        %769 = vmatmul.f32.gmra.mxu0 %v727
        %v770 = vpop.f32.mrf.mxu0
        %v771 = vadd.f32 0.0, %v770
        %772 = vdwg.mxu0
        %v773 = vadd.f32 %v687, %v750
        %v774 = vadd.f32 %v688, %v753
        %v775 = vadd.f32 %v689, %v756
        %v776 = vadd.f32 %v690, %v759
        %v777 = vadd.f32 %v691, %v762
        %v778 = vadd.f32 %v692, %v765
        %v779 = vadd.f32 %v693, %v768
        %v780 = vadd.f32 %v694, %v771
        %s781 = scalar_lea.vmem %s276, 16
        %v782 = vld [vmem:[%s781] sm:$0xff]
        %v783 = vld [vmem:[%s781 + $0x10] sm:$0xff]
        %v784 = vld [vmem:[%s781 + $0x20] sm:$0xff]
        %v785 = vld [vmem:[%s781 + $0x30] sm:$0xff]
        %v786 = vld [vmem:[%s781 + $0x40] sm:$0xff]
        %v787 = vld [vmem:[%s781 + $0x50] sm:$0xff]
        %v788 = vld [vmem:[%s781 + $0x60] sm:$0xff]
        %v789 = vld [vmem:[%s781 + $0x70] sm:$0xff]
        %s790 = scalar_lea.vmem %s1, 24
        %v791 = vld [vmem:[%s790] sm:$0xf]
        %v793 = vsel %vm297, %v782, 0
        %v796 = vsel %vm297, %v783, 0
        %v799 = vsel %vm297, %v784, 0
        %v802 = vsel %vm297, %v785, 0
        %v805 = vsel %vm297, %v786, 0
        %v808 = vsel %vm297, %v787, 0
        %v811 = vsel %vm297, %v788, 0
        %v814 = vsel %vm297, %v789, 0
        %v817 = vsel %vm322, %v791, 0
        %819 = vmatpush.msra.mxu0 0.0
        %820 = vmatpush.msra.mxu0 0.0
        %821 = vmatpush.msra.mxu0 0.0
        %822 = vmatpush.msra.mxu0 0.0
        %823 = vmatpush.msra.mxu0 0.0
        %824 = vmatpush.msra.mxu0 0.0
        %825 = vmatpush.msra.mxu0 0.0
        %826 = vmatpush.msra.mxu0 0.0
        %827 = vmatpush.msra.mxu0 0.0
        %828 = vmatpush.msra.mxu0 0.0
        %829 = vmatpush.msra.mxu0 0.0
        %830 = vmatpush.msra.mxu0 0.0
        %831 = vmatpush.msra.mxu0 0.0
        %832 = vmatpush.msra.mxu0 0.0
        %833 = vmatpush.msra.mxu0 0.0
        %834 = vmatpush.msra.mxu0 %v817
        %835 = vmatmul.f32.gmra.mxu0 %v793
        %v836 = vpop.f32.mrf.mxu0
        %v837 = vadd.f32 0.0, %v836
        %838 = vmatmul.f32.gmra.mxu0 %v796
        %v839 = vpop.f32.mrf.mxu0
        %v840 = vadd.f32 0.0, %v839
        %841 = vmatmul.f32.gmra.mxu0 %v799
        %v842 = vpop.f32.mrf.mxu0
        %v843 = vadd.f32 0.0, %v842
        %844 = vmatmul.f32.gmra.mxu0 %v802
        %v845 = vpop.f32.mrf.mxu0
        %v846 = vadd.f32 0.0, %v845
        %847 = vmatmul.f32.gmra.mxu0 %v805
        %v848 = vpop.f32.mrf.mxu0
        %v849 = vadd.f32 0.0, %v848
        %850 = vmatmul.f32.gmra.mxu0 %v808
        %v851 = vpop.f32.mrf.mxu0
        %v852 = vadd.f32 0.0, %v851
        %853 = vmatmul.f32.gmra.mxu0 %v811
        %v854 = vpop.f32.mrf.mxu0
        %v855 = vadd.f32 0.0, %v854
        %856 = vmatmul.f32.gmra.mxu0 %v814
        %v857 = vpop.f32.mrf.mxu0
        %v858 = vadd.f32 0.0, %v857
        %859 = vdwg.mxu0
        %v860 = vadd.f32 %v773, %v837
        %v861 = vadd.f32 %v774, %v840
        %v862 = vadd.f32 %v775, %v843
        %v863 = vadd.f32 %v776, %v846
        %v864 = vadd.f32 %v777, %v849
        %v865 = vadd.f32 %v778, %v852
        %v866 = vadd.f32 %v779, %v855
        %v867 = vadd.f32 %v780, %v858
        %s868 = scalar_lea.vmem %s276, 160
        %v869 = vld [vmem:[%s868] sm:$0xff]
        %v870 = vld [vmem:[%s868 + $0x10] sm:$0xff]
        %v871 = vld [vmem:[%s868 + $0x20] sm:$0xff]
        %v872 = vld [vmem:[%s868 + $0x30] sm:$0xff]
        %v873 = vld [vmem:[%s868 + $0x40] sm:$0xff]
        %v874 = vld [vmem:[%s868 + $0x50] sm:$0xff]
        %v875 = vld [vmem:[%s868 + $0x60] sm:$0xff]
        %v876 = vld [vmem:[%s868 + $0x70] sm:$0xff]
        %s877 = scalar_lea.vmem %s1, 28
        %v878 = vld [vmem:[%s877] sm:$0xf]
        %v880 = vsel %vm297, %v869, 0
        %v883 = vsel %vm297, %v870, 0
        %v886 = vsel %vm297, %v871, 0
        %v889 = vsel %vm297, %v872, 0
        %v892 = vsel %vm297, %v873, 0
        %v895 = vsel %vm297, %v874, 0
        %v898 = vsel %vm297, %v875, 0
        %v901 = vsel %vm297, %v876, 0
        %v904 = vsel %vm322, %v878, 0
        %906 = vmatpush.msra.mxu0 0.0
        %907 = vmatpush.msra.mxu0 0.0
        %908 = vmatpush.msra.mxu0 0.0
        %909 = vmatpush.msra.mxu0 0.0
        %910 = vmatpush.msra.mxu0 0.0
        %911 = vmatpush.msra.mxu0 0.0
        %912 = vmatpush.msra.mxu0 0.0
        %913 = vmatpush.msra.mxu0 0.0
        %914 = vmatpush.msra.mxu0 0.0
        %915 = vmatpush.msra.mxu0 0.0
        %916 = vmatpush.msra.mxu0 0.0
        %917 = vmatpush.msra.mxu0 0.0
        %918 = vmatpush.msra.mxu0 0.0
        %919 = vmatpush.msra.mxu0 0.0
        %920 = vmatpush.msra.mxu0 0.0
        %921 = vmatpush.msra.mxu0 %v904
        %922 = vmatmul.f32.gmra.mxu0 %v880
        %v923 = vpop.f32.mrf.mxu0
        %v924 = vadd.f32 0.0, %v923
        %925 = vmatmul.f32.gmra.mxu0 %v883
        %v926 = vpop.f32.mrf.mxu0
        %v927 = vadd.f32 0.0, %v926
        %928 = vmatmul.f32.gmra.mxu0 %v886
        %v929 = vpop.f32.mrf.mxu0
        %v930 = vadd.f32 0.0, %v929
        %931 = vmatmul.f32.gmra.mxu0 %v889
        %v932 = vpop.f32.mrf.mxu0
        %v933 = vadd.f32 0.0, %v932
        %934 = vmatmul.f32.gmra.mxu0 %v892
        %v935 = vpop.f32.mrf.mxu0
        %v936 = vadd.f32 0.0, %v935
        %937 = vmatmul.f32.gmra.mxu0 %v895
        %v938 = vpop.f32.mrf.mxu0
        %v939 = vadd.f32 0.0, %v938
        %940 = vmatmul.f32.gmra.mxu0 %v898
        %v941 = vpop.f32.mrf.mxu0
        %v942 = vadd.f32 0.0, %v941
        %943 = vmatmul.f32.gmra.mxu0 %v901
        %v944 = vpop.f32.mrf.mxu0
        %v945 = vadd.f32 0.0, %v944
        %946 = vdwg.mxu0
        %v947 = vadd.f32 %v860, %v924
        %v948 = vadd.f32 %v861, %v927
        %v949 = vadd.f32 %v862, %v930
        %v950 = vadd.f32 %v863, %v933
        %v951 = vadd.f32 %v864, %v936
        %v952 = vadd.f32 %v865, %v939
        %v953 = vadd.f32 %v866, %v942
        %v954 = vadd.f32 %v867, %v945
        %v955 = vld [vmem:[%s781 + $0x1] sm:$0xff]
        %v956 = vld [vmem:[%s781 + $0x11] sm:$0xff]
        %v957 = vld [vmem:[%s781 + $0x21] sm:$0xff]
        %v958 = vld [vmem:[%s781 + $0x31] sm:$0xff]
        %v959 = vld [vmem:[%s781 + $0x41] sm:$0xff]
        %v960 = vld [vmem:[%s781 + $0x51] sm:$0xff]
        %v961 = vld [vmem:[%s781 + $0x61] sm:$0xff]
        %v962 = vld [vmem:[%s781 + $0x71] sm:$0xff]
        %s963 = scalar_lea.vmem %s1, 32
        %v964 = vld [vmem:[%s963] sm:$0xf]
        %v966 = vsel %vm297, %v955, 0
        %v969 = vsel %vm297, %v956, 0
        %v972 = vsel %vm297, %v957, 0
        %v975 = vsel %vm297, %v958, 0
        %v978 = vsel %vm297, %v959, 0
        %v981 = vsel %vm297, %v960, 0
        %v984 = vsel %vm297, %v961, 0
        %v987 = vsel %vm297, %v962, 0
        %v990 = vsel %vm322, %v964, 0
        %992 = vmatpush.msra.mxu0 0.0
        %993 = vmatpush.msra.mxu0 0.0
        %994 = vmatpush.msra.mxu0 0.0
        %995 = vmatpush.msra.mxu0 0.0
        %996 = vmatpush.msra.mxu0 0.0
        %997 = vmatpush.msra.mxu0 0.0
        %998 = vmatpush.msra.mxu0 0.0
        %999 = vmatpush.msra.mxu0 0.0
        %1000 = vmatpush.msra.mxu0 0.0
        %1001 = vmatpush.msra.mxu0 0.0
        %1002 = vmatpush.msra.mxu0 0.0
        %1003 = vmatpush.msra.mxu0 0.0
        %1004 = vmatpush.msra.mxu0 0.0
        %1005 = vmatpush.msra.mxu0 0.0
        %1006 = vmatpush.msra.mxu0 0.0
        %1007 = vmatpush.msra.mxu0 %v990
        %1008 = vmatmul.f32.gmra.mxu0 %v966
        %v1009 = vpop.f32.mrf.mxu0
        %v1010 = vadd.f32 0.0, %v1009
        %1011 = vmatmul.f32.gmra.mxu0 %v969
        %v1012 = vpop.f32.mrf.mxu0
        %v1013 = vadd.f32 0.0, %v1012
        %1014 = vmatmul.f32.gmra.mxu0 %v972
        %v1015 = vpop.f32.mrf.mxu0
        %v1016 = vadd.f32 0.0, %v1015
        %1017 = vmatmul.f32.gmra.mxu0 %v975
        %v1018 = vpop.f32.mrf.mxu0
        %v1019 = vadd.f32 0.0, %v1018
        %1020 = vmatmul.f32.gmra.mxu0 %v978
        %v1021 = vpop.f32.mrf.mxu0
        %v1022 = vadd.f32 0.0, %v1021
        %1023 = vmatmul.f32.gmra.mxu0 %v981
        %v1024 = vpop.f32.mrf.mxu0
        %v1025 = vadd.f32 0.0, %v1024
        %1026 = vmatmul.f32.gmra.mxu0 %v984
        %v1027 = vpop.f32.mrf.mxu0
        %v1028 = vadd.f32 0.0, %v1027
        %1029 = vmatmul.f32.gmra.mxu0 %v987
        %v1030 = vpop.f32.mrf.mxu0
        %v1031 = vadd.f32 0.0, %v1030
        %1032 = vdwg.mxu0
        %v1033 = vadd.f32 %v947, %v1010
        %v1034 = vadd.f32 %v948, %v1013
        %v1035 = vadd.f32 %v949, %v1016
        %v1036 = vadd.f32 %v950, %v1019
        %v1037 = vadd.f32 %v951, %v1022
        %v1038 = vadd.f32 %v952, %v1025
        %v1039 = vadd.f32 %v953, %v1028
        %v1040 = vadd.f32 %v954, %v1031
        %v1041 = vld [vmem:[%s2] sm:$0x1]
        %v1043 = vperm.slane %v1041, 0
        %v1045 = vadd.f32 %v1033, %v1043
        %v1046 = vadd.f32 %v1034, %v1043
        %v1047 = vadd.f32 %v1035, %v1043
        %v1048 = vadd.f32 %v1036, %v1043
        %v1049 = vadd.f32 %v1037, %v1043
        %v1050 = vadd.f32 %v1038, %v1043
        %v1051 = vadd.f32 %v1039, %v1043
        %v1052 = vadd.f32 %v1040, %v1043
        %v1053 = vmax.f32 %v1045, 0.0
        %v1054 = vmax.f32 %v1046, 0.0
        %v1055 = vmax.f32 %v1047, 0.0
        %v1056 = vmax.f32 %v1048, 0.0
        %v1057 = vmax.f32 %v1049, 0.0
        %v1058 = vmax.f32 %v1050, 0.0
        %v1059 = vmax.f32 %v1051, 0.0
        %v1060 = vmax.f32 %v1052, 0.0
        %1061 = vst [vmem:[#allocation2] sm:$0xff] 0.0
        %1062 = vst [vmem:[#allocation2 + $0x8] sm:$0x3] 0.0
        %1063 = vst [vmem:[#allocation2 + $0x10] sm:$0xff] 0.0
        %1064 = vst [vmem:[#allocation2 + $0x18] sm:$0x3] 0.0
        %1065 = vst [vmem:[#allocation2 + $0x20] sm:$0xff] 0.0
        %1066 = vst [vmem:[#allocation2 + $0x28] sm:$0x3] 0.0
        %1067 = vst [vmem:[#allocation2 + $0x30] sm:$0xff] 0.0
        %1068 = vst [vmem:[#allocation2 + $0x38] sm:$0x3] 0.0
        %1069 = vst [vmem:[#allocation2 + $0x40] sm:$0xff] 0.0
        %1070 = vst [vmem:[#allocation2 + $0x48] sm:$0x3] 0.0
        %1071 = vst [vmem:[#allocation2 + $0x50] sm:$0xff] 0.0
        %1072 = vst [vmem:[#allocation2 + $0x58] sm:$0x3] 0.0
        %1073 = vst [vmem:[#allocation2 + $0x60] sm:$0xff] 0.0
        %1074 = vst [vmem:[#allocation2 + $0x68] sm:$0x3] 0.0
        %1075 = vst [vmem:[#allocation2 + $0x70] sm:$0xff] 0.0
        %1076 = vst [vmem:[#allocation2 + $0x78] sm:$0x3] 0.0
        %1077 = vst [vmem:[#allocation2 + $0x80] sm:$0xff] 0.0
        %1078 = vst [vmem:[#allocation2 + $0x88] sm:$0x3] 0.0
        %1079 = vst [vmem:[#allocation2 + $0x90] sm:$0xff] 0.0
        %1080 = vst [vmem:[#allocation2 + $0x98] sm:$0x3] 0.0
        %s1081 = scalar_lea.vmem [#allocation2], 16
        %1082 = vst [vmem:[%s1081 + $0x1] sm:$0xff] %v1053
        %1083 = vst [vmem:[%s1081 + $0x11] sm:$0xff] %v1054
        %1084 = vst [vmem:[%s1081 + $0x21] sm:$0xff] %v1055
        %1085 = vst [vmem:[%s1081 + $0x31] sm:$0xff] %v1056
        %1086 = vst [vmem:[%s1081 + $0x41] sm:$0xff] %v1057
        %1087 = vst [vmem:[%s1081 + $0x51] sm:$0xff] %v1058
        %1088 = vst [vmem:[%s1081 + $0x61] sm:$0xff] %v1059
        %1089 = vst [vmem:[%s1081 + $0x71] sm:$0xff] %v1060
        %v1090 = vld [vmem:[%s608] sm:$0xff]
        %v1091 = vld [vmem:[%s608 + $0x10] sm:$0xff]
        %v1092 = vld [vmem:[%s608 + $0x20] sm:$0xff]
        %v1093 = vld [vmem:[%s608 + $0x30] sm:$0xff]
        %v1094 = vld [vmem:[%s608 + $0x40] sm:$0xff]
        %v1095 = vld [vmem:[%s608 + $0x50] sm:$0xff]
        %v1096 = vld [vmem:[%s608 + $0x60] sm:$0xff]
        %v1097 = vld [vmem:[%s608 + $0x70] sm:$0xff]
        %v1098 = vld [vmem:[%s5] sm:$0xf]
        %v1099 = vld [vmem:[%s6] sm:$0x1]
        %v1101 = vperm.slane %v1099, 0
        %v1104 = vsel %vm297, %v1090, 0
        %v1107 = vsel %vm297, %v1091, 0
        %v1110 = vsel %vm297, %v1092, 0
        %v1113 = vsel %vm297, %v1093, 0
        %v1116 = vsel %vm297, %v1094, 0
        %v1119 = vsel %vm297, %v1095, 0
        %v1122 = vsel %vm297, %v1096, 0
        %v1125 = vsel %vm297, %v1097, 0
        %v1128 = vsel %vm322, %v1098, 0
        %1130 = vmatpush.msra.mxu0 0.0
        %1131 = vmatpush.msra.mxu0 0.0
        %1132 = vmatpush.msra.mxu0 0.0
        %1133 = vmatpush.msra.mxu0 0.0
        %1134 = vmatpush.msra.mxu0 0.0
        %1135 = vmatpush.msra.mxu0 0.0
        %1136 = vmatpush.msra.mxu0 0.0
        %1137 = vmatpush.msra.mxu0 0.0
        %1138 = vmatpush.msra.mxu0 0.0
        %1139 = vmatpush.msra.mxu0 0.0
        %1140 = vmatpush.msra.mxu0 0.0
        %1141 = vmatpush.msra.mxu0 0.0
        %1142 = vmatpush.msra.mxu0 0.0
        %1143 = vmatpush.msra.mxu0 0.0
        %1144 = vmatpush.msra.mxu0 0.0
        %1145 = vmatpush.msra.mxu0 %v1128
        %1146 = vmatmul.f32.gmra.mxu0 %v1104
        %v1147 = vpop.f32.mrf.mxu0
        %v1148 = vadd.f32 %v1101, %v1147
        %1149 = vmatmul.f32.gmra.mxu0 %v1107
        %v1150 = vpop.f32.mrf.mxu0
        %v1151 = vadd.f32 %v1101, %v1150
        %1152 = vmatmul.f32.gmra.mxu0 %v1110
        %v1153 = vpop.f32.mrf.mxu0
        %v1154 = vadd.f32 %v1101, %v1153
        %1155 = vmatmul.f32.gmra.mxu0 %v1113
        %v1156 = vpop.f32.mrf.mxu0
        %v1157 = vadd.f32 %v1101, %v1156
        %1158 = vmatmul.f32.gmra.mxu0 %v1116
        %v1159 = vpop.f32.mrf.mxu0
        %v1160 = vadd.f32 %v1101, %v1159
        %1161 = vmatmul.f32.gmra.mxu0 %v1119
        %v1162 = vpop.f32.mrf.mxu0
        %v1163 = vadd.f32 %v1101, %v1162
        %1164 = vmatmul.f32.gmra.mxu0 %v1122
        %v1165 = vpop.f32.mrf.mxu0
        %v1166 = vadd.f32 %v1101, %v1165
        %1167 = vmatmul.f32.gmra.mxu0 %v1125
        %v1168 = vpop.f32.mrf.mxu0
        %v1169 = vadd.f32 %v1101, %v1168
        %1170 = vdwg.mxu0
        %v1171 = vld [vmem:[#allocation2] sm:$0xff]
        %v1172 = vld [vmem:[#allocation2 + $0x10] sm:$0xff]
        %v1173 = vld [vmem:[#allocation2 + $0x20] sm:$0xff]
        %v1174 = vld [vmem:[#allocation2 + $0x30] sm:$0xff]
        %v1175 = vld [vmem:[#allocation2 + $0x40] sm:$0xff]
        %v1176 = vld [vmem:[#allocation2 + $0x50] sm:$0xff]
        %v1177 = vld [vmem:[#allocation2 + $0x60] sm:$0xff]
        %v1178 = vld [vmem:[#allocation2 + $0x70] sm:$0xff]
        %v1179 = vld [vmem:[%s3] sm:$0xff]
        %v1180 = vld [vmem:[%s3 + $0x8] sm:$0xff]
        %v1181 = vld [vmem:[%s3 + $0x10] sm:$0xff]
        %v1182 = vld [vmem:[%s3 + $0x18] sm:$0xff]
        %v1183 = vld [vmem:[%s3 + $0x20] sm:$0xff]
        %v1184 = vld [vmem:[%s3 + $0x28] sm:$0xff]
        %v1185 = vld [vmem:[%s3 + $0x30] sm:$0xff]
        %v1186 = vld [vmem:[%s3 + $0x38] sm:$0xff]
        %v1187 = vld [vmem:[%s3 + $0x40] sm:$0xff]
        %v1188 = vld [vmem:[%s3 + $0x48] sm:$0xff]
        %v1189 = vld [vmem:[%s3 + $0x50] sm:$0xff]
        %v1190 = vld [vmem:[%s3 + $0x58] sm:$0xff]
        %v1191 = vld [vmem:[%s3 + $0x60] sm:$0xff]
        %v1192 = vld [vmem:[%s3 + $0x68] sm:$0xff]
        %v1193 = vld [vmem:[%s3 + $0x70] sm:$0xff]
        %v1194 = vld [vmem:[%s3 + $0x78] sm:$0xff]
        %1195 = vmatpush.msra.mxu0 %v1194
        %1196 = vmatpush.msra.mxu0 %v1193
        %1197 = vmatpush.msra.mxu0 %v1192
        %1198 = vmatpush.msra.mxu0 %v1191
        %1199 = vmatpush.msra.mxu0 %v1190
        %1200 = vmatpush.msra.mxu0 %v1189
        %1201 = vmatpush.msra.mxu0 %v1188
        %1202 = vmatpush.msra.mxu0 %v1187
        %1203 = vmatpush.msra.mxu0 %v1186
        %1204 = vmatpush.msra.mxu0 %v1185
        %1205 = vmatpush.msra.mxu0 %v1184
        %1206 = vmatpush.msra.mxu0 %v1183
        %1207 = vmatpush.msra.mxu0 %v1182
        %1208 = vmatpush.msra.mxu0 %v1181
        %1209 = vmatpush.msra.mxu0 %v1180
        %1210 = vmatpush.msra.mxu0 %v1179
        %1211 = vmatmul.f32.gmra.mxu0 %v1171
        %v1212 = vpop.f32.mrf.mxu0
        %v1213 = vadd.f32 0.0, %v1212
        %1214 = vmatmul.f32.gmra.mxu0 %v1172
        %v1215 = vpop.f32.mrf.mxu0
        %v1216 = vadd.f32 0.0, %v1215
        %1217 = vmatmul.f32.gmra.mxu0 %v1173
        %v1218 = vpop.f32.mrf.mxu0
        %v1219 = vadd.f32 0.0, %v1218
        %1220 = vmatmul.f32.gmra.mxu0 %v1174
        %v1221 = vpop.f32.mrf.mxu0
        %v1222 = vadd.f32 0.0, %v1221
        %1223 = vmatmul.f32.gmra.mxu0 %v1175
        %v1224 = vpop.f32.mrf.mxu0
        %v1225 = vadd.f32 0.0, %v1224
        %1226 = vmatmul.f32.gmra.mxu0 %v1176
        %v1227 = vpop.f32.mrf.mxu0
        %v1228 = vadd.f32 0.0, %v1227
        %1229 = vmatmul.f32.gmra.mxu0 %v1177
        %v1230 = vpop.f32.mrf.mxu0
        %v1231 = vadd.f32 0.0, %v1230
        %1232 = vmatmul.f32.gmra.mxu0 %v1178
        %v1233 = vpop.f32.mrf.mxu0
        %v1234 = vadd.f32 0.0, %v1233
        %1235 = vdwg.mxu0
        %v1236 = vadd.f32 %v1148, %v1213
        %v1237 = vadd.f32 %v1151, %v1216
        %v1238 = vadd.f32 %v1154, %v1219
        %v1239 = vadd.f32 %v1157, %v1222
        %v1240 = vadd.f32 %v1160, %v1225
        %v1241 = vadd.f32 %v1163, %v1228
        %v1242 = vadd.f32 %v1166, %v1231
        %v1243 = vadd.f32 %v1169, %v1234
        %v1244 = vld [vmem:[#allocation2 + $0x1] sm:$0xff]
        %v1245 = vld [vmem:[#allocation2 + $0x11] sm:$0xff]
        %v1246 = vld [vmem:[#allocation2 + $0x21] sm:$0xff]
        %v1247 = vld [vmem:[#allocation2 + $0x31] sm:$0xff]
        %v1248 = vld [vmem:[#allocation2 + $0x41] sm:$0xff]
        %v1249 = vld [vmem:[#allocation2 + $0x51] sm:$0xff]
        %v1250 = vld [vmem:[#allocation2 + $0x61] sm:$0xff]
        %v1251 = vld [vmem:[#allocation2 + $0x71] sm:$0xff]
        %s1252 = scalar_lea.vmem %s3, 128
        %v1253 = vld [vmem:[%s1252] sm:$0xff]
        %v1254 = vld [vmem:[%s1252 + $0x8] sm:$0xff]
        %v1255 = vld [vmem:[%s1252 + $0x10] sm:$0xff]
        %v1256 = vld [vmem:[%s1252 + $0x18] sm:$0xff]
        %v1257 = vld [vmem:[%s1252 + $0x20] sm:$0xff]
        %v1258 = vld [vmem:[%s1252 + $0x28] sm:$0xff]
        %v1259 = vld [vmem:[%s1252 + $0x30] sm:$0xff]
        %v1260 = vld [vmem:[%s1252 + $0x38] sm:$0xff]
        %v1261 = vld [vmem:[%s1252 + $0x40] sm:$0xff]
        %v1262 = vld [vmem:[%s1252 + $0x48] sm:$0xff]
        %v1263 = vld [vmem:[%s1252 + $0x50] sm:$0xff]
        %v1264 = vld [vmem:[%s1252 + $0x58] sm:$0xff]
        %v1265 = vld [vmem:[%s1252 + $0x60] sm:$0xff]
        %v1266 = vld [vmem:[%s1252 + $0x68] sm:$0xff]
        %v1267 = vld [vmem:[%s1252 + $0x70] sm:$0xff]
        %v1268 = vld [vmem:[%s1252 + $0x78] sm:$0xff]
        %1269 = vmatpush.msra.mxu0 %v1268
        %1270 = vmatpush.msra.mxu0 %v1267
        %1271 = vmatpush.msra.mxu0 %v1266
        %1272 = vmatpush.msra.mxu0 %v1265
        %1273 = vmatpush.msra.mxu0 %v1264
        %1274 = vmatpush.msra.mxu0 %v1263
        %1275 = vmatpush.msra.mxu0 %v1262
        %1276 = vmatpush.msra.mxu0 %v1261
        %1277 = vmatpush.msra.mxu0 %v1260
        %1278 = vmatpush.msra.mxu0 %v1259
        %1279 = vmatpush.msra.mxu0 %v1258
        %1280 = vmatpush.msra.mxu0 %v1257
        %1281 = vmatpush.msra.mxu0 %v1256
        %1282 = vmatpush.msra.mxu0 %v1255
        %1283 = vmatpush.msra.mxu0 %v1254
        %1284 = vmatpush.msra.mxu0 %v1253
        %1285 = vmatmul.f32.gmra.mxu0 %v1244
        %v1286 = vpop.f32.mrf.mxu0
        %v1287 = vadd.f32 0.0, %v1286
        %1288 = vmatmul.f32.gmra.mxu0 %v1245
        %v1289 = vpop.f32.mrf.mxu0
        %v1290 = vadd.f32 0.0, %v1289
        %1291 = vmatmul.f32.gmra.mxu0 %v1246
        %v1292 = vpop.f32.mrf.mxu0
        %v1293 = vadd.f32 0.0, %v1292
        %1294 = vmatmul.f32.gmra.mxu0 %v1247
        %v1295 = vpop.f32.mrf.mxu0
        %v1296 = vadd.f32 0.0, %v1295
        %1297 = vmatmul.f32.gmra.mxu0 %v1248
        %v1298 = vpop.f32.mrf.mxu0
        %v1299 = vadd.f32 0.0, %v1298
        %1300 = vmatmul.f32.gmra.mxu0 %v1249
        %v1301 = vpop.f32.mrf.mxu0
        %v1302 = vadd.f32 0.0, %v1301
        %1303 = vmatmul.f32.gmra.mxu0 %v1250
        %v1304 = vpop.f32.mrf.mxu0
        %v1305 = vadd.f32 0.0, %v1304
        %1306 = vmatmul.f32.gmra.mxu0 %v1251
        %v1307 = vpop.f32.mrf.mxu0
        %v1308 = vadd.f32 0.0, %v1307
        %1309 = vdwg.mxu0
        %v1310 = vadd.f32 %v1236, %v1287
        %v1311 = vadd.f32 %v1237, %v1290
        %v1312 = vadd.f32 %v1238, %v1293
        %v1313 = vadd.f32 %v1239, %v1296
        %v1314 = vadd.f32 %v1240, %v1299
        %v1315 = vadd.f32 %v1241, %v1302
        %v1316 = vadd.f32 %v1242, %v1305
        %v1317 = vadd.f32 %v1243, %v1308
        %v1318 = vld [vmem:[#allocation2 + $0x2] sm:$0xff]
        %v1319 = vld [vmem:[#allocation2 + $0x12] sm:$0xff]
        %v1320 = vld [vmem:[#allocation2 + $0x22] sm:$0xff]
        %v1321 = vld [vmem:[#allocation2 + $0x32] sm:$0xff]
        %v1322 = vld [vmem:[#allocation2 + $0x42] sm:$0xff]
        %v1323 = vld [vmem:[#allocation2 + $0x52] sm:$0xff]
        %v1324 = vld [vmem:[#allocation2 + $0x62] sm:$0xff]
        %v1325 = vld [vmem:[#allocation2 + $0x72] sm:$0xff]
        %s1326 = scalar_lea.vmem %s3, 256
        %v1327 = vld [vmem:[%s1326] sm:$0xff]
        %v1328 = vld [vmem:[%s1326 + $0x8] sm:$0xff]
        %v1329 = vld [vmem:[%s1326 + $0x10] sm:$0xff]
        %v1330 = vld [vmem:[%s1326 + $0x18] sm:$0xff]
        %v1331 = vld [vmem:[%s1326 + $0x20] sm:$0xff]
        %v1332 = vld [vmem:[%s1326 + $0x28] sm:$0xff]
        %v1333 = vld [vmem:[%s1326 + $0x30] sm:$0xff]
        %v1334 = vld [vmem:[%s1326 + $0x38] sm:$0xff]
        %v1335 = vld [vmem:[%s1326 + $0x40] sm:$0xff]
        %v1336 = vld [vmem:[%s1326 + $0x48] sm:$0xff]
        %v1337 = vld [vmem:[%s1326 + $0x50] sm:$0xff]
        %v1338 = vld [vmem:[%s1326 + $0x58] sm:$0xff]
        %v1339 = vld [vmem:[%s1326 + $0x60] sm:$0xff]
        %v1340 = vld [vmem:[%s1326 + $0x68] sm:$0xff]
        %v1341 = vld [vmem:[%s1326 + $0x70] sm:$0xff]
        %v1342 = vld [vmem:[%s1326 + $0x78] sm:$0xff]
        %1343 = vmatpush.msra.mxu0 %v1342
        %1344 = vmatpush.msra.mxu0 %v1341
        %1345 = vmatpush.msra.mxu0 %v1340
        %1346 = vmatpush.msra.mxu0 %v1339
        %1347 = vmatpush.msra.mxu0 %v1338
        %1348 = vmatpush.msra.mxu0 %v1337
        %1349 = vmatpush.msra.mxu0 %v1336
        %1350 = vmatpush.msra.mxu0 %v1335
        %1351 = vmatpush.msra.mxu0 %v1334
        %1352 = vmatpush.msra.mxu0 %v1333
        %1353 = vmatpush.msra.mxu0 %v1332
        %1354 = vmatpush.msra.mxu0 %v1331
        %1355 = vmatpush.msra.mxu0 %v1330
        %1356 = vmatpush.msra.mxu0 %v1329
        %1357 = vmatpush.msra.mxu0 %v1328
        %1358 = vmatpush.msra.mxu0 %v1327
        %1359 = vmatmul.f32.gmra.mxu0 %v1318
        %v1360 = vpop.f32.mrf.mxu0
        %v1361 = vadd.f32 0.0, %v1360
        %1362 = vmatmul.f32.gmra.mxu0 %v1319
        %v1363 = vpop.f32.mrf.mxu0
        %v1364 = vadd.f32 0.0, %v1363
        %1365 = vmatmul.f32.gmra.mxu0 %v1320
        %v1366 = vpop.f32.mrf.mxu0
        %v1367 = vadd.f32 0.0, %v1366
        %1368 = vmatmul.f32.gmra.mxu0 %v1321
        %v1369 = vpop.f32.mrf.mxu0
        %v1370 = vadd.f32 0.0, %v1369
        %1371 = vmatmul.f32.gmra.mxu0 %v1322
        %v1372 = vpop.f32.mrf.mxu0
        %v1373 = vadd.f32 0.0, %v1372
        %1374 = vmatmul.f32.gmra.mxu0 %v1323
        %v1375 = vpop.f32.mrf.mxu0
        %v1376 = vadd.f32 0.0, %v1375
        %1377 = vmatmul.f32.gmra.mxu0 %v1324
        %v1378 = vpop.f32.mrf.mxu0
        %v1379 = vadd.f32 0.0, %v1378
        %1380 = vmatmul.f32.gmra.mxu0 %v1325
        %v1381 = vpop.f32.mrf.mxu0
        %v1382 = vadd.f32 0.0, %v1381
        %1383 = vdwg.mxu0
        %v1384 = vadd.f32 %v1310, %v1361
        %v1385 = vadd.f32 %v1311, %v1364
        %v1386 = vadd.f32 %v1312, %v1367
        %v1387 = vadd.f32 %v1313, %v1370
        %v1388 = vadd.f32 %v1314, %v1373
        %v1389 = vadd.f32 %v1315, %v1376
        %v1390 = vadd.f32 %v1316, %v1379
        %v1391 = vadd.f32 %v1317, %v1382
        %v1392 = vld [vmem:[%s1081] sm:$0xff]
        %v1393 = vld [vmem:[%s1081 + $0x10] sm:$0xff]
        %v1394 = vld [vmem:[%s1081 + $0x20] sm:$0xff]
        %v1395 = vld [vmem:[%s1081 + $0x30] sm:$0xff]
        %v1396 = vld [vmem:[%s1081 + $0x40] sm:$0xff]
        %v1397 = vld [vmem:[%s1081 + $0x50] sm:$0xff]
        %v1398 = vld [vmem:[%s1081 + $0x60] sm:$0xff]
        %v1399 = vld [vmem:[%s1081 + $0x70] sm:$0xff]
        %s1400 = scalar_lea.vmem %s3, 384
        %v1401 = vld [vmem:[%s1400] sm:$0xff]
        %v1402 = vld [vmem:[%s1400 + $0x8] sm:$0xff]
        %v1403 = vld [vmem:[%s1400 + $0x10] sm:$0xff]
        %v1404 = vld [vmem:[%s1400 + $0x18] sm:$0xff]
        %v1405 = vld [vmem:[%s1400 + $0x20] sm:$0xff]
        %v1406 = vld [vmem:[%s1400 + $0x28] sm:$0xff]
        %v1407 = vld [vmem:[%s1400 + $0x30] sm:$0xff]
        %v1408 = vld [vmem:[%s1400 + $0x38] sm:$0xff]
        %v1409 = vld [vmem:[%s1400 + $0x40] sm:$0xff]
        %v1410 = vld [vmem:[%s1400 + $0x48] sm:$0xff]
        %v1411 = vld [vmem:[%s1400 + $0x50] sm:$0xff]
        %v1412 = vld [vmem:[%s1400 + $0x58] sm:$0xff]
        %v1413 = vld [vmem:[%s1400 + $0x60] sm:$0xff]
        %v1414 = vld [vmem:[%s1400 + $0x68] sm:$0xff]
        %v1415 = vld [vmem:[%s1400 + $0x70] sm:$0xff]
        %v1416 = vld [vmem:[%s1400 + $0x78] sm:$0xff]
        %1417 = vmatpush.msra.mxu0 %v1416
        %1418 = vmatpush.msra.mxu0 %v1415
        %1419 = vmatpush.msra.mxu0 %v1414
        %1420 = vmatpush.msra.mxu0 %v1413
        %1421 = vmatpush.msra.mxu0 %v1412
        %1422 = vmatpush.msra.mxu0 %v1411
        %1423 = vmatpush.msra.mxu0 %v1410
        %1424 = vmatpush.msra.mxu0 %v1409
        %1425 = vmatpush.msra.mxu0 %v1408
        %1426 = vmatpush.msra.mxu0 %v1407
        %1427 = vmatpush.msra.mxu0 %v1406
        %1428 = vmatpush.msra.mxu0 %v1405
        %1429 = vmatpush.msra.mxu0 %v1404
        %1430 = vmatpush.msra.mxu0 %v1403
        %1431 = vmatpush.msra.mxu0 %v1402
        %1432 = vmatpush.msra.mxu0 %v1401
        %1433 = vmatmul.f32.gmra.mxu0 %v1392
        %v1434 = vpop.f32.mrf.mxu0
        %v1435 = vadd.f32 0.0, %v1434
        %1436 = vmatmul.f32.gmra.mxu0 %v1393
        %v1437 = vpop.f32.mrf.mxu0
        %v1438 = vadd.f32 0.0, %v1437
        %1439 = vmatmul.f32.gmra.mxu0 %v1394
        %v1440 = vpop.f32.mrf.mxu0
        %v1441 = vadd.f32 0.0, %v1440
        %1442 = vmatmul.f32.gmra.mxu0 %v1395
        %v1443 = vpop.f32.mrf.mxu0
        %v1444 = vadd.f32 0.0, %v1443
        %1445 = vmatmul.f32.gmra.mxu0 %v1396
        %v1446 = vpop.f32.mrf.mxu0
        %v1447 = vadd.f32 0.0, %v1446
        %1448 = vmatmul.f32.gmra.mxu0 %v1397
        %v1449 = vpop.f32.mrf.mxu0
        %v1450 = vadd.f32 0.0, %v1449
        %1451 = vmatmul.f32.gmra.mxu0 %v1398
        %v1452 = vpop.f32.mrf.mxu0
        %v1453 = vadd.f32 0.0, %v1452
        %1454 = vmatmul.f32.gmra.mxu0 %v1399
        %v1455 = vpop.f32.mrf.mxu0
        %v1456 = vadd.f32 0.0, %v1455
        %1457 = vdwg.mxu0
        %v1458 = vadd.f32 %v1384, %v1435
        %v1459 = vadd.f32 %v1385, %v1438
        %v1460 = vadd.f32 %v1386, %v1441
        %v1461 = vadd.f32 %v1387, %v1444
        %v1462 = vadd.f32 %v1388, %v1447
        %v1463 = vadd.f32 %v1389, %v1450
        %v1464 = vadd.f32 %v1390, %v1453
        %v1465 = vadd.f32 %v1391, %v1456
        %v1466 = vld [vmem:[%s1081 + $0x1] sm:$0xff]
        %v1467 = vld [vmem:[%s1081 + $0x11] sm:$0xff]
        %v1468 = vld [vmem:[%s1081 + $0x21] sm:$0xff]
        %v1469 = vld [vmem:[%s1081 + $0x31] sm:$0xff]
        %v1470 = vld [vmem:[%s1081 + $0x41] sm:$0xff]
        %v1471 = vld [vmem:[%s1081 + $0x51] sm:$0xff]
        %v1472 = vld [vmem:[%s1081 + $0x61] sm:$0xff]
        %v1473 = vld [vmem:[%s1081 + $0x71] sm:$0xff]
        %s1474 = scalar_lea.vmem %s3, 512
        %v1475 = vld [vmem:[%s1474] sm:$0xff]
        %v1476 = vld [vmem:[%s1474 + $0x8] sm:$0xff]
        %v1477 = vld [vmem:[%s1474 + $0x10] sm:$0xff]
        %v1478 = vld [vmem:[%s1474 + $0x18] sm:$0xff]
        %v1479 = vld [vmem:[%s1474 + $0x20] sm:$0xff]
        %v1480 = vld [vmem:[%s1474 + $0x28] sm:$0xff]
        %v1481 = vld [vmem:[%s1474 + $0x30] sm:$0xff]
        %v1482 = vld [vmem:[%s1474 + $0x38] sm:$0xff]
        %v1483 = vld [vmem:[%s1474 + $0x40] sm:$0xff]
        %v1484 = vld [vmem:[%s1474 + $0x48] sm:$0xff]
        %v1485 = vld [vmem:[%s1474 + $0x50] sm:$0xff]
        %v1486 = vld [vmem:[%s1474 + $0x58] sm:$0xff]
        %v1487 = vld [vmem:[%s1474 + $0x60] sm:$0xff]
        %v1488 = vld [vmem:[%s1474 + $0x68] sm:$0xff]
        %v1489 = vld [vmem:[%s1474 + $0x70] sm:$0xff]
        %v1490 = vld [vmem:[%s1474 + $0x78] sm:$0xff]
        %1491 = vmatpush.msra.mxu0 %v1490
        %1492 = vmatpush.msra.mxu0 %v1489
        %1493 = vmatpush.msra.mxu0 %v1488
        %1494 = vmatpush.msra.mxu0 %v1487
        %1495 = vmatpush.msra.mxu0 %v1486
        %1496 = vmatpush.msra.mxu0 %v1485
        %1497 = vmatpush.msra.mxu0 %v1484
        %1498 = vmatpush.msra.mxu0 %v1483
        %1499 = vmatpush.msra.mxu0 %v1482
        %1500 = vmatpush.msra.mxu0 %v1481
        %1501 = vmatpush.msra.mxu0 %v1480
        %1502 = vmatpush.msra.mxu0 %v1479
        %1503 = vmatpush.msra.mxu0 %v1478
        %1504 = vmatpush.msra.mxu0 %v1477
        %1505 = vmatpush.msra.mxu0 %v1476
        %1506 = vmatpush.msra.mxu0 %v1475
        %1507 = vmatmul.f32.gmra.mxu0 %v1466
        %v1508 = vpop.f32.mrf.mxu0
        %v1509 = vadd.f32 0.0, %v1508
        %1510 = vmatmul.f32.gmra.mxu0 %v1467
        %v1511 = vpop.f32.mrf.mxu0
        %v1512 = vadd.f32 0.0, %v1511
        %1513 = vmatmul.f32.gmra.mxu0 %v1468
        %v1514 = vpop.f32.mrf.mxu0
        %v1515 = vadd.f32 0.0, %v1514
        %1516 = vmatmul.f32.gmra.mxu0 %v1469
        %v1517 = vpop.f32.mrf.mxu0
        %v1518 = vadd.f32 0.0, %v1517
        %1519 = vmatmul.f32.gmra.mxu0 %v1470
        %v1520 = vpop.f32.mrf.mxu0
        %v1521 = vadd.f32 0.0, %v1520
        %1522 = vmatmul.f32.gmra.mxu0 %v1471
        %v1523 = vpop.f32.mrf.mxu0
        %v1524 = vadd.f32 0.0, %v1523
        %1525 = vmatmul.f32.gmra.mxu0 %v1472
        %v1526 = vpop.f32.mrf.mxu0
        %v1527 = vadd.f32 0.0, %v1526
        %1528 = vmatmul.f32.gmra.mxu0 %v1473
        %v1529 = vpop.f32.mrf.mxu0
        %v1530 = vadd.f32 0.0, %v1529
        %1531 = vdwg.mxu0
        %v1532 = vadd.f32 %v1458, %v1509
        %v1533 = vadd.f32 %v1459, %v1512
        %v1534 = vadd.f32 %v1460, %v1515
        %v1535 = vadd.f32 %v1461, %v1518
        %v1536 = vadd.f32 %v1462, %v1521
        %v1537 = vadd.f32 %v1463, %v1524
        %v1538 = vadd.f32 %v1464, %v1527
        %v1539 = vadd.f32 %v1465, %v1530
        %v1540 = vld [vmem:[%s1081 + $0x2] sm:$0xff]
        %v1541 = vld [vmem:[%s1081 + $0x12] sm:$0xff]
        %v1542 = vld [vmem:[%s1081 + $0x22] sm:$0xff]
        %v1543 = vld [vmem:[%s1081 + $0x32] sm:$0xff]
        %v1544 = vld [vmem:[%s1081 + $0x42] sm:$0xff]
        %v1545 = vld [vmem:[%s1081 + $0x52] sm:$0xff]
        %v1546 = vld [vmem:[%s1081 + $0x62] sm:$0xff]
        %v1547 = vld [vmem:[%s1081 + $0x72] sm:$0xff]
        %s1548 = scalar_lea.vmem %s3, 640
        %v1549 = vld [vmem:[%s1548] sm:$0xff]
        %v1550 = vld [vmem:[%s1548 + $0x8] sm:$0xff]
        %v1551 = vld [vmem:[%s1548 + $0x10] sm:$0xff]
        %v1552 = vld [vmem:[%s1548 + $0x18] sm:$0xff]
        %v1553 = vld [vmem:[%s1548 + $0x20] sm:$0xff]
        %v1554 = vld [vmem:[%s1548 + $0x28] sm:$0xff]
        %v1555 = vld [vmem:[%s1548 + $0x30] sm:$0xff]
        %v1556 = vld [vmem:[%s1548 + $0x38] sm:$0xff]
        %v1557 = vld [vmem:[%s1548 + $0x40] sm:$0xff]
        %v1558 = vld [vmem:[%s1548 + $0x48] sm:$0xff]
        %v1559 = vld [vmem:[%s1548 + $0x50] sm:$0xff]
        %v1560 = vld [vmem:[%s1548 + $0x58] sm:$0xff]
        %v1561 = vld [vmem:[%s1548 + $0x60] sm:$0xff]
        %v1562 = vld [vmem:[%s1548 + $0x68] sm:$0xff]
        %v1563 = vld [vmem:[%s1548 + $0x70] sm:$0xff]
        %v1564 = vld [vmem:[%s1548 + $0x78] sm:$0xff]
        %1565 = vmatpush.msra.mxu0 %v1564
        %1566 = vmatpush.msra.mxu0 %v1563
        %1567 = vmatpush.msra.mxu0 %v1562
        %1568 = vmatpush.msra.mxu0 %v1561
        %1569 = vmatpush.msra.mxu0 %v1560
        %1570 = vmatpush.msra.mxu0 %v1559
        %1571 = vmatpush.msra.mxu0 %v1558
        %1572 = vmatpush.msra.mxu0 %v1557
        %1573 = vmatpush.msra.mxu0 %v1556
        %1574 = vmatpush.msra.mxu0 %v1555
        %1575 = vmatpush.msra.mxu0 %v1554
        %1576 = vmatpush.msra.mxu0 %v1553
        %1577 = vmatpush.msra.mxu0 %v1552
        %1578 = vmatpush.msra.mxu0 %v1551
        %1579 = vmatpush.msra.mxu0 %v1550
        %1580 = vmatpush.msra.mxu0 %v1549
        %1581 = vmatmul.f32.gmra.mxu0 %v1540
        %v1582 = vpop.f32.mrf.mxu0
        %v1583 = vadd.f32 0.0, %v1582
        %1584 = vmatmul.f32.gmra.mxu0 %v1541
        %v1585 = vpop.f32.mrf.mxu0
        %v1586 = vadd.f32 0.0, %v1585
        %1587 = vmatmul.f32.gmra.mxu0 %v1542
        %v1588 = vpop.f32.mrf.mxu0
        %v1589 = vadd.f32 0.0, %v1588
        %1590 = vmatmul.f32.gmra.mxu0 %v1543
        %v1591 = vpop.f32.mrf.mxu0
        %v1592 = vadd.f32 0.0, %v1591
        %1593 = vmatmul.f32.gmra.mxu0 %v1544
        %v1594 = vpop.f32.mrf.mxu0
        %v1595 = vadd.f32 0.0, %v1594
        %1596 = vmatmul.f32.gmra.mxu0 %v1545
        %v1597 = vpop.f32.mrf.mxu0
        %v1598 = vadd.f32 0.0, %v1597
        %1599 = vmatmul.f32.gmra.mxu0 %v1546
        %v1600 = vpop.f32.mrf.mxu0
        %v1601 = vadd.f32 0.0, %v1600
        %1602 = vmatmul.f32.gmra.mxu0 %v1547
        %v1603 = vpop.f32.mrf.mxu0
        %v1604 = vadd.f32 0.0, %v1603
        %1605 = vdwg.mxu0
        %v1606 = vadd.f32 %v1532, %v1583
        %v1607 = vadd.f32 %v1533, %v1586
        %v1608 = vadd.f32 %v1534, %v1589
        %v1609 = vadd.f32 %v1535, %v1592
        %v1610 = vadd.f32 %v1536, %v1595
        %v1611 = vadd.f32 %v1537, %v1598
        %v1612 = vadd.f32 %v1538, %v1601
        %v1613 = vadd.f32 %v1539, %v1604
        %s1614 = scalar_lea.vmem [#allocation2], 32
        %v1615 = vld [vmem:[%s1614] sm:$0xff]
        %v1616 = vld [vmem:[%s1614 + $0x10] sm:$0xff]
        %v1617 = vld [vmem:[%s1614 + $0x20] sm:$0xff]
        %v1618 = vld [vmem:[%s1614 + $0x30] sm:$0xff]
        %v1619 = vld [vmem:[%s1614 + $0x40] sm:$0xff]
        %v1620 = vld [vmem:[%s1614 + $0x50] sm:$0xff]
        %v1621 = vld [vmem:[%s1614 + $0x60] sm:$0xff]
        %v1622 = vld [vmem:[%s1614 + $0x70] sm:$0xff]
        %s1623 = scalar_lea.vmem %s3, 768
        %v1624 = vld [vmem:[%s1623] sm:$0xff]
        %v1625 = vld [vmem:[%s1623 + $0x8] sm:$0xff]
        %v1626 = vld [vmem:[%s1623 + $0x10] sm:$0xff]
        %v1627 = vld [vmem:[%s1623 + $0x18] sm:$0xff]
        %v1628 = vld [vmem:[%s1623 + $0x20] sm:$0xff]
        %v1629 = vld [vmem:[%s1623 + $0x28] sm:$0xff]
        %v1630 = vld [vmem:[%s1623 + $0x30] sm:$0xff]
        %v1631 = vld [vmem:[%s1623 + $0x38] sm:$0xff]
        %v1632 = vld [vmem:[%s1623 + $0x40] sm:$0xff]
        %v1633 = vld [vmem:[%s1623 + $0x48] sm:$0xff]
        %v1634 = vld [vmem:[%s1623 + $0x50] sm:$0xff]
        %v1635 = vld [vmem:[%s1623 + $0x58] sm:$0xff]
        %v1636 = vld [vmem:[%s1623 + $0x60] sm:$0xff]
        %v1637 = vld [vmem:[%s1623 + $0x68] sm:$0xff]
        %v1638 = vld [vmem:[%s1623 + $0x70] sm:$0xff]
        %v1639 = vld [vmem:[%s1623 + $0x78] sm:$0xff]
        %1640 = vmatpush.msra.mxu0 %v1639
        %1641 = vmatpush.msra.mxu0 %v1638
        %1642 = vmatpush.msra.mxu0 %v1637
        %1643 = vmatpush.msra.mxu0 %v1636
        %1644 = vmatpush.msra.mxu0 %v1635
        %1645 = vmatpush.msra.mxu0 %v1634
        %1646 = vmatpush.msra.mxu0 %v1633
        %1647 = vmatpush.msra.mxu0 %v1632
        %1648 = vmatpush.msra.mxu0 %v1631
        %1649 = vmatpush.msra.mxu0 %v1630
        %1650 = vmatpush.msra.mxu0 %v1629
        %1651 = vmatpush.msra.mxu0 %v1628
        %1652 = vmatpush.msra.mxu0 %v1627
        %1653 = vmatpush.msra.mxu0 %v1626
        %1654 = vmatpush.msra.mxu0 %v1625
        %1655 = vmatpush.msra.mxu0 %v1624
        %1656 = vmatmul.f32.gmra.mxu0 %v1615
        %v1657 = vpop.f32.mrf.mxu0
        %v1658 = vadd.f32 0.0, %v1657
        %1659 = vmatmul.f32.gmra.mxu0 %v1616
        %v1660 = vpop.f32.mrf.mxu0
        %v1661 = vadd.f32 0.0, %v1660
        %1662 = vmatmul.f32.gmra.mxu0 %v1617
        %v1663 = vpop.f32.mrf.mxu0
        %v1664 = vadd.f32 0.0, %v1663
        %1665 = vmatmul.f32.gmra.mxu0 %v1618
        %v1666 = vpop.f32.mrf.mxu0
        %v1667 = vadd.f32 0.0, %v1666
        %1668 = vmatmul.f32.gmra.mxu0 %v1619
        %v1669 = vpop.f32.mrf.mxu0
        %v1670 = vadd.f32 0.0, %v1669
        %1671 = vmatmul.f32.gmra.mxu0 %v1620
        %v1672 = vpop.f32.mrf.mxu0
        %v1673 = vadd.f32 0.0, %v1672
        %1674 = vmatmul.f32.gmra.mxu0 %v1621
        %v1675 = vpop.f32.mrf.mxu0
        %v1676 = vadd.f32 0.0, %v1675
        %1677 = vmatmul.f32.gmra.mxu0 %v1622
        %v1678 = vpop.f32.mrf.mxu0
        %v1679 = vadd.f32 0.0, %v1678
        %1680 = vdwg.mxu0
        %v1681 = vadd.f32 %v1606, %v1658
        %v1682 = vadd.f32 %v1607, %v1661
        %v1683 = vadd.f32 %v1608, %v1664
        %v1684 = vadd.f32 %v1609, %v1667
        %v1685 = vadd.f32 %v1610, %v1670
        %v1686 = vadd.f32 %v1611, %v1673
        %v1687 = vadd.f32 %v1612, %v1676
        %v1688 = vadd.f32 %v1613, %v1679
        %v1689 = vld [vmem:[%s1614 + $0x1] sm:$0xff]
        %v1690 = vld [vmem:[%s1614 + $0x11] sm:$0xff]
        %v1691 = vld [vmem:[%s1614 + $0x21] sm:$0xff]
        %v1692 = vld [vmem:[%s1614 + $0x31] sm:$0xff]
        %v1693 = vld [vmem:[%s1614 + $0x41] sm:$0xff]
        %v1694 = vld [vmem:[%s1614 + $0x51] sm:$0xff]
        %v1695 = vld [vmem:[%s1614 + $0x61] sm:$0xff]
        %v1696 = vld [vmem:[%s1614 + $0x71] sm:$0xff]
        %s1697 = scalar_lea.vmem %s3, 896
        %v1698 = vld [vmem:[%s1697] sm:$0xff]
        %v1699 = vld [vmem:[%s1697 + $0x8] sm:$0xff]
        %v1700 = vld [vmem:[%s1697 + $0x10] sm:$0xff]
        %v1701 = vld [vmem:[%s1697 + $0x18] sm:$0xff]
        %v1702 = vld [vmem:[%s1697 + $0x20] sm:$0xff]
        %v1703 = vld [vmem:[%s1697 + $0x28] sm:$0xff]
        %v1704 = vld [vmem:[%s1697 + $0x30] sm:$0xff]
        %v1705 = vld [vmem:[%s1697 + $0x38] sm:$0xff]
        %v1706 = vld [vmem:[%s1697 + $0x40] sm:$0xff]
        %v1707 = vld [vmem:[%s1697 + $0x48] sm:$0xff]
        %v1708 = vld [vmem:[%s1697 + $0x50] sm:$0xff]
        %v1709 = vld [vmem:[%s1697 + $0x58] sm:$0xff]
        %v1710 = vld [vmem:[%s1697 + $0x60] sm:$0xff]
        %v1711 = vld [vmem:[%s1697 + $0x68] sm:$0xff]
        %v1712 = vld [vmem:[%s1697 + $0x70] sm:$0xff]
        %v1713 = vld [vmem:[%s1697 + $0x78] sm:$0xff]
        %1714 = vmatpush.msra.mxu0 %v1713
        %1715 = vmatpush.msra.mxu0 %v1712
        %1716 = vmatpush.msra.mxu0 %v1711
        %1717 = vmatpush.msra.mxu0 %v1710
        %1718 = vmatpush.msra.mxu0 %v1709
        %1719 = vmatpush.msra.mxu0 %v1708
        %1720 = vmatpush.msra.mxu0 %v1707
        %1721 = vmatpush.msra.mxu0 %v1706
        %1722 = vmatpush.msra.mxu0 %v1705
        %1723 = vmatpush.msra.mxu0 %v1704
        %1724 = vmatpush.msra.mxu0 %v1703
        %1725 = vmatpush.msra.mxu0 %v1702
        %1726 = vmatpush.msra.mxu0 %v1701
        %1727 = vmatpush.msra.mxu0 %v1700
        %1728 = vmatpush.msra.mxu0 %v1699
        %1729 = vmatpush.msra.mxu0 %v1698
        %1730 = vmatmul.f32.gmra.mxu0 %v1689
        %v1731 = vpop.f32.mrf.mxu0
        %v1732 = vadd.f32 0.0, %v1731
        %1733 = vmatmul.f32.gmra.mxu0 %v1690
        %v1734 = vpop.f32.mrf.mxu0
        %v1735 = vadd.f32 0.0, %v1734
        %1736 = vmatmul.f32.gmra.mxu0 %v1691
        %v1737 = vpop.f32.mrf.mxu0
        %v1738 = vadd.f32 0.0, %v1737
        %1739 = vmatmul.f32.gmra.mxu0 %v1692
        %v1740 = vpop.f32.mrf.mxu0
        %v1741 = vadd.f32 0.0, %v1740
        %1742 = vmatmul.f32.gmra.mxu0 %v1693
        %v1743 = vpop.f32.mrf.mxu0
        %v1744 = vadd.f32 0.0, %v1743
        %1745 = vmatmul.f32.gmra.mxu0 %v1694
        %v1746 = vpop.f32.mrf.mxu0
        %v1747 = vadd.f32 0.0, %v1746
        %1748 = vmatmul.f32.gmra.mxu0 %v1695
        %v1749 = vpop.f32.mrf.mxu0
        %v1750 = vadd.f32 0.0, %v1749
        %1751 = vmatmul.f32.gmra.mxu0 %v1696
        %v1752 = vpop.f32.mrf.mxu0
        %v1753 = vadd.f32 0.0, %v1752
        %1754 = vdwg.mxu0
        %v1755 = vadd.f32 %v1681, %v1732
        %v1756 = vadd.f32 %v1682, %v1735
        %v1757 = vadd.f32 %v1683, %v1738
        %v1758 = vadd.f32 %v1684, %v1741
        %v1759 = vadd.f32 %v1685, %v1744
        %v1760 = vadd.f32 %v1686, %v1747
        %v1761 = vadd.f32 %v1687, %v1750
        %v1762 = vadd.f32 %v1688, %v1753
        %v1763 = vld [vmem:[%s1614 + $0x2] sm:$0xff]
        %v1764 = vld [vmem:[%s1614 + $0x12] sm:$0xff]
        %v1765 = vld [vmem:[%s1614 + $0x22] sm:$0xff]
        %v1766 = vld [vmem:[%s1614 + $0x32] sm:$0xff]
        %v1767 = vld [vmem:[%s1614 + $0x42] sm:$0xff]
        %v1768 = vld [vmem:[%s1614 + $0x52] sm:$0xff]
        %v1769 = vld [vmem:[%s1614 + $0x62] sm:$0xff]
        %v1770 = vld [vmem:[%s1614 + $0x72] sm:$0xff]
        %s1771 = scalar_lea.vmem %s3, 1024
        %v1772 = vld [vmem:[%s1771] sm:$0xff]
        %v1773 = vld [vmem:[%s1771 + $0x8] sm:$0xff]
        %v1774 = vld [vmem:[%s1771 + $0x10] sm:$0xff]
        %v1775 = vld [vmem:[%s1771 + $0x18] sm:$0xff]
        %v1776 = vld [vmem:[%s1771 + $0x20] sm:$0xff]
        %v1777 = vld [vmem:[%s1771 + $0x28] sm:$0xff]
        %v1778 = vld [vmem:[%s1771 + $0x30] sm:$0xff]
        %v1779 = vld [vmem:[%s1771 + $0x38] sm:$0xff]
        %v1780 = vld [vmem:[%s1771 + $0x40] sm:$0xff]
        %v1781 = vld [vmem:[%s1771 + $0x48] sm:$0xff]
        %v1782 = vld [vmem:[%s1771 + $0x50] sm:$0xff]
        %v1783 = vld [vmem:[%s1771 + $0x58] sm:$0xff]
        %v1784 = vld [vmem:[%s1771 + $0x60] sm:$0xff]
        %v1785 = vld [vmem:[%s1771 + $0x68] sm:$0xff]
        %v1786 = vld [vmem:[%s1771 + $0x70] sm:$0xff]
        %v1787 = vld [vmem:[%s1771 + $0x78] sm:$0xff]
        %1788 = vmatpush.msra.mxu0 %v1787
        %1789 = vmatpush.msra.mxu0 %v1786
        %1790 = vmatpush.msra.mxu0 %v1785
        %1791 = vmatpush.msra.mxu0 %v1784
        %1792 = vmatpush.msra.mxu0 %v1783
        %1793 = vmatpush.msra.mxu0 %v1782
        %1794 = vmatpush.msra.mxu0 %v1781
        %1795 = vmatpush.msra.mxu0 %v1780
        %1796 = vmatpush.msra.mxu0 %v1779
        %1797 = vmatpush.msra.mxu0 %v1778
        %1798 = vmatpush.msra.mxu0 %v1777
        %1799 = vmatpush.msra.mxu0 %v1776
        %1800 = vmatpush.msra.mxu0 %v1775
        %1801 = vmatpush.msra.mxu0 %v1774
        %1802 = vmatpush.msra.mxu0 %v1773
        %1803 = vmatpush.msra.mxu0 %v1772
        %1804 = vmatmul.f32.gmra.mxu0 %v1763
        %v1805 = vpop.f32.mrf.mxu0
        %v1806 = vadd.f32 0.0, %v1805
        %1807 = vmatmul.f32.gmra.mxu0 %v1764
        %v1808 = vpop.f32.mrf.mxu0
        %v1809 = vadd.f32 0.0, %v1808
        %1810 = vmatmul.f32.gmra.mxu0 %v1765
        %v1811 = vpop.f32.mrf.mxu0
        %v1812 = vadd.f32 0.0, %v1811
        %1813 = vmatmul.f32.gmra.mxu0 %v1766
        %v1814 = vpop.f32.mrf.mxu0
        %v1815 = vadd.f32 0.0, %v1814
        %1816 = vmatmul.f32.gmra.mxu0 %v1767
        %v1817 = vpop.f32.mrf.mxu0
        %v1818 = vadd.f32 0.0, %v1817
        %1819 = vmatmul.f32.gmra.mxu0 %v1768
        %v1820 = vpop.f32.mrf.mxu0
        %v1821 = vadd.f32 0.0, %v1820
        %1822 = vmatmul.f32.gmra.mxu0 %v1769
        %v1823 = vpop.f32.mrf.mxu0
        %v1824 = vadd.f32 0.0, %v1823
        %1825 = vmatmul.f32.gmra.mxu0 %v1770
        %v1826 = vpop.f32.mrf.mxu0
        %v1827 = vadd.f32 0.0, %v1826
        %1828 = vdwg.mxu0
        %v1829 = vadd.f32 %v1755, %v1806
        %v1830 = vadd.f32 %v1756, %v1809
        %v1831 = vadd.f32 %v1757, %v1812
        %v1832 = vadd.f32 %v1758, %v1815
        %v1833 = vadd.f32 %v1759, %v1818
        %v1834 = vadd.f32 %v1760, %v1821
        %v1835 = vadd.f32 %v1761, %v1824
        %v1836 = vadd.f32 %v1762, %v1827
        %v1837 = vld [vmem:[%s4] sm:$0x1]
        %v1839 = vperm.slane %v1837, 0
        %v1841 = vadd.f32 %v1829, %v1839
        %v1842 = vadd.f32 %v1830, %v1839
        %v1843 = vadd.f32 %v1831, %v1839
        %v1844 = vadd.f32 %v1832, %v1839
        %v1845 = vadd.f32 %v1833, %v1839
        %v1846 = vadd.f32 %v1834, %v1839
        %v1847 = vadd.f32 %v1835, %v1839
        %v1848 = vadd.f32 %v1836, %v1839
        %v1849 = vmax.f32 %v1841, 0.0
        %v1850 = vmax.f32 %v1842, 0.0
        %v1851 = vmax.f32 %v1843, 0.0
        %v1852 = vmax.f32 %v1844, 0.0
        %v1853 = vmax.f32 %v1845, 0.0
        %v1854 = vmax.f32 %v1846, 0.0
        %v1855 = vmax.f32 %v1847, 0.0
        %v1856 = vmax.f32 %v1848, 0.0
        %1857 = vst [vmem:[%s271] sm:$0xff] %v1849
        %1858 = vst [vmem:[%s271 + $0x8] sm:$0xff] %v1850
        %1859 = vst [vmem:[%s271 + $0x10] sm:$0xff] %v1851
        %1860 = vst [vmem:[%s271 + $0x18] sm:$0xff] %v1852
        %1861 = vst [vmem:[%s271 + $0x20] sm:$0xff] %v1853
        %1862 = vst [vmem:[%s271 + $0x28] sm:$0xff] %v1854
        %1863 = vst [vmem:[%s271 + $0x30] sm:$0xff] %v1855
        %1864 = vst [vmem:[%s271 + $0x38] sm:$0xff] %v1856
        %s1865 = sand.u32 %s181, 1
        %s1866 = scalar_lea.sflag [#allocation4], %s1865
        %s1867 = sand.u32 %s181, 1
        %s1868 = smul.addr %s1867, 64
        %s1869 = scalar_lea.vmem [#allocation3], %s1868
        // Predicated region
        $region49: #{tpu_custom_call.1} parent=47 // pred_check
          %p1870 = pneg %p191
        $region50: #{tpu_custom_call.1} parent=47 // pred_check_branch
          %1872 = sbr.rel (%p1870) target = $region52
        $region51: #{tpu_custom_call.1} parent=47 // pred_region
          %1874 = vsyncadd %s1866, 0
          %s1875 = smul.addr %s21, 8
          %s1876 = smul.addr %s1875, 8
          %s1877 = scalar_lea.hbm %s7, %s1876
          %s1878 = sshll.u32 %s1869, 4
          %s1879 = int_to_ptr.vmem [resolvable:$true] %s1878
          %s1880 = sshll.u32 %s1877, 4
          %s1881 = int_to_ptr.hbm [resolvable:$true] %s1880
          %1886 = dma.vmem_to_hbm [thread:$0]  %s1879, 1024, %s1881, %s1866, 128, 128, 8
        $region52: #{tpu_custom_call.1} parent=47 // pred_fallthru
          _
      $region48: #{tpu_custom_call.1} parent=5 // pred_fallthru
        _
      %p1887 = scmp.le.s32.totalorder 2, %s16
      // Predicated region
      $region53: #{tpu_custom_call.1} parent=5 // pred_check
        %p1888 = pneg %p1887
      $region54: #{tpu_custom_call.1} parent=5 // pred_check_branch
        %1890 = sbr.rel (%p1888) target = $region56
      $region55: #{tpu_custom_call.1} parent=5 // pred_region
        %s1891 = ssub.s32 %s16, 2
        // Predicated region
        $region57: #{tpu_custom_call.1} parent=55 // pred_check
          %p1892 = pneg %p197
        $region58: #{tpu_custom_call.1} parent=55 // pred_check_branch
          %1894 = sbr.rel (%p1892) target = $region60
        $region59: #{tpu_custom_call.1} parent=55 // pred_region
          %s1895 = sand.u32 %s182, 1
          %s1896 = scalar_lea.sflag [#allocation4], %s1895
          %s1897 = sand.u32 %s182, 1
          %s1898 = smul.addr %s1897, 64
          %s1899 = scalar_lea.vmem [#allocation3], %s1898
          %1901 = dma.done %s1896, 1024
        $region60: #{tpu_custom_call.1} parent=55 // pred_fallthru
          _
      $region56: #{tpu_custom_call.1} parent=5 // pred_fallthru
        _
    $region6: #{tpu_custom_call.1} parent=1 // loop_footer
      %s20 = sadd.s32 1, %s16
    $region7: #{tpu_custom_call.1} parent=1 // loop_footer_branch
      %15 = sbr.rel target = $region3
    $region8: #{tpu_custom_call.1} parent=1 // loop_exit
      _
    %1902 = vsyncpa [#allocation4], 1
    %s1903 = scalar_lea.sflag [#allocation4], 1
    %1904 = vsyncpa %s1903, 1

</llo_original>
